<compile_context>
chip_gen: v6e
topology: v6e:2x2x1
jax: 0.10.0
libtpu: 0.0.40
codegen_flags: <defaults>
</compile_context>

<pallas_src>
import functools

import jax
import jax.numpy as jnp
from jax.experimental import pallas as pl
from jax.experimental.pallas import tpu as pltpu


NUM_SPLITS = 2  # leading "parallel" grid axis (uses both TCs on v7x)


def _round_up(a: int, b: int) -> int:
    return (a + b - 1) // b * b


# --------------------------------------------------------------------------
# Kernel 1: streaming global_add_pool -> per-core-slice partial sums (G, F)
# --------------------------------------------------------------------------
def _pool_kernel(tile_map_ref, batch_ref, x_ref, partial_ref, *,
                 tn, tpc, n_nodes, num_graphs, needs_mask):
    """One grid step: fold one (TN, F) slab of nodes into this core's partial.

    tile_map_ref: (NUM_SPLITS*tpc,) int32 SMEM  logical tile -> clamped block idx
                  (only consumed by the index_maps; unused in the body)
    batch_ref   : (1, TN)  int32   node -> graph id
    x_ref       : (TN, F)  x.dtype node features (natural layout, lane-dense F)
    partial_ref : (G, F)   f32     this core-slice's pooled accumulator (output)
    """
    del tile_map_ref  # only used by the BlockSpec index_maps
    c = pl.program_id(0)          # core-slice index (parallel)
    k = pl.program_id(1)          # tile index within the slice (reduction)

    @pl.when(k == 0)
    def _init():
        partial_ref[...] = jnp.zeros_like(partial_ref)

    G = num_graphs
    batch = batch_ref[...]                                        # (1, TN) int32
    gids = jax.lax.broadcasted_iota(jnp.int32, (G, tn), 0)        # (G, TN)
    match = gids == batch                                         # (G, TN) bool

    # torch's x.float(): per-tile upcast *before* summation.
    x_tile = x_ref[...].astype(jnp.float32)                       # (TN, F)

    if needs_mask:
        # Global node offset of this (logical) tile.  Tiles whose logical index
        # exceeds the real tile count (odd split) or whose tail crosses N are
        # masked here; the DMA itself stays in-bounds via tile_map clamping.
        start = (c * tpc + k) * tn
        lane_idx = jax.lax.broadcasted_iota(jnp.int32, (1, tn), 1) + start
        match = match & (lane_idx < n_nodes)
        row_idx = jax.lax.broadcasted_iota(jnp.int32, (tn, 1), 0) + start
        x_tile = jnp.where(row_idx < n_nodes, x_tile, 0.0)

    one_hot = match.astype(jnp.float32)                           # (G, TN)
    # Segment-sum of this slab on the MXU: (G, TN) @ (TN, F) -> (G, F).
    partial_ref[...] += jnp.dot(one_hot, x_tile,
                                preferred_element_type=jnp.float32)


# --------------------------------------------------------------------------
# Kernel 2: combine partials + tiny MLP (off the streaming hot path)
# --------------------------------------------------------------------------
def _combine_mlp_kernel(partial_ref, w1_ref, b1_ref, w2_ref, b2_ref,
                        out_ref, pooled_ref):
    pooled = partial_ref[0]
    for s in range(1, partial_ref.shape[0]):
        pooled = pooled + partial_ref[s]                          # (G, F)
    pooled_ref[...] = pooled
    h = jnp.dot(pooled, w1_ref[...],
                preferred_element_type=jnp.float32) + b1_ref[...]
    h = jnp.maximum(h, 0.0)                                       # relu
    out_ref[...] = jnp.dot(h, w2_ref[...],
                           preferred_element_type=jnp.float32) + b2_ref[...]


def prepare_params(w1, b1, w2, b2):
    """One-time parameter prep (transpose/cast/reshape) off the hot path."""
    H, F = w1.shape
    T = w2.shape[0]
    return (w1.T.astype(jnp.float32),               # (F, H)
            b1.reshape(1, H).astype(jnp.float32),   # (1, H)
            w2.T.astype(jnp.float32),               # (H, T)
            b2.reshape(1, T).astype(jnp.float32))   # (1, T)


@functools.partial(jax.jit, static_argnames=("num_graphs", "target_slab_bytes"))
def simple_mlp_graph_predictor(x, batch, params, *, num_graphs,
                               target_slab_bytes=None):
    """x: (N, F) node features (any float dtype), batch: (N,) int graph ids."""
    w1_t, b1_2d, w2_t, b2_2d = params
    N, F = x.shape
    H = w1_t.shape[1]
    T = w2_t.shape[1]
    G = int(num_graphs)
    itemsize = x.dtype.itemsize

    batch_row = batch.astype(jnp.int32).reshape(1, N)             # (1, N), tiny

    # ---- per-generation VMEM budget (v7x: 64 MiB physical fallback) ----
    try:
        phys_vmem = int(pltpu.get_tpu_info().vmem_capacity_bytes)
    except Exception:
        phys_vmem = 64 * 1024 * 1024
    budget = max(phys_vmem // 2 - (8 << 20), 16 << 20)

    if target_slab_bytes is None:
        # Multi-MiB slabs amortize the ~0.35us per-step overhead; go bigger
        # where VMEM allows (v5e/v6e), smaller on v7x.
        slab_target = max(2 << 20, min(8 << 20, budget // 4))
    else:
        slab_target = int(target_slab_bytes)

    def _vmem_need(tn_):
        stream = 2 * tn_ * (F * itemsize + 4)        # double-buffered x + batch
        temps = 4 * tn_ * (G + F + 2)                # one-hot, iotas, f32 x copy
        resident = 2 * 4 * G * F + (2 << 20)         # partial acc + slack
        return stream + temps + resident

    # ---- adaptive node tile (lane-aligned), bounded by the VMEM budget ----
    tn = _round_up(max(slab_target // max(F * itemsize, 1), 128), 128)
    tn = min(tn, _round_up(N, 128))
    while tn > 128 and _vmem_need(tn) > budget:      # also bounds (G, TN) temps
        tn = max(128, _round_up(tn // 2, 128))
    if tn >= N:
        tn = N                                       # full-array block is always legal

    n_tiles = pl.cdiv(N, tn)
    tpc = pl.cdiv(n_tiles, NUM_SPLITS)               # tiles per core slice
    needs_mask = (NUM_SPLITS * tpc != n_tiles) or (n_tiles * tn != N)

    # logical tile -> clamped block index (keeps every DMA in-bounds; the
    # duplicated tile is zeroed by the in-kernel logical-index mask).
    logical = jnp.arange(NUM_SPLITS * tpc, dtype=jnp.int32)
    tile_map = jnp.minimum(logical, n_tiles - 1)

    vmem_limit = int(min(max(2 * _vmem_need(tn), 32 << 20), phys_vmem - (8 << 20)))

    cost = pl.CostEstimate(
        flops=2 * G * F * NUM_SPLITS * tpc * tn,
        transcendentals=0,
        bytes_accessed=int(N * F * itemsize + N * 4 + NUM_SPLITS * G * F * 4),
    )

    pool_kernel = functools.partial(
        _pool_kernel, tn=tn, tpc=tpc, n_nodes=N, num_graphs=G,
        needs_mask=needs_mask)

    partials = pl.pallas_call(
        pool_kernel,
        out_shape=jax.ShapeDtypeStruct((NUM_SPLITS, G, F), jnp.float32),
        grid_spec=pltpu.PrefetchScalarGridSpec(
            num_scalar_prefetch=1,
            grid=(NUM_SPLITS, tpc),
            in_specs=[
                # batch ids, lane-dense (streamed)
                pl.BlockSpec((1, tn), lambda c, k, tm: (0, tm[c * tpc + k])),
                # node features, natural (N, F) layout (streamed, contiguous)
                pl.BlockSpec((tn, F), lambda c, k, tm: (tm[c * tpc + k], 0)),
            ],
            # per-core-slice partial pooled sums: accumulate directly into the
            # resident output block (no scratch accumulator).
            out_specs=pl.BlockSpec((None, G, F), lambda c, k, tm: (c, 0, 0)),
        ),
        compiler_params=pltpu.CompilerParams(
            dimension_semantics=("parallel", "arbitrary"),
            vmem_limit_bytes=vmem_limit,
        ),
        cost_estimate=cost,
    )(tile_map, batch_row, x)

    # Tiny combine + MLP kernel (whole arrays resident in VMEM).
    out, pooled = pl.pallas_call(
        _combine_mlp_kernel,
        out_shape=(jax.ShapeDtypeStruct((G, T), jnp.float32),
                   jax.ShapeDtypeStruct((G, F), jnp.float32)),
    )(partials, w1_t, b1_2d, w2_t, b2_2d)
    return out, pooled


if __name__ == "__main__":
    # Small deterministic problem consistent with the module:
    #   N nodes, F = dim_node_features, G graphs, H = hidden_units, T = dim_target.
    N, F, G, H, T = 1000, 16, 8, 32, 4

    key = jax.random.PRNGKey(0)
    kx, kw1, kb1, kw2, kb2 = jax.random.split(key, 5)

    x = jax.random.normal(kx, (N, F), dtype=jnp.float32)
    # Valid, sorted batch vector with unequal graph sizes.
    batch = (jnp.arange(N, dtype=jnp.int32) * G) // N
    # edge_index exists in the torch Data object but is unused by this predictor.

    # Deterministic synthetic parameters (shapes follow nn.Linear):
    w1 = 0.1 * jax.random.normal(kw1, (H, F), dtype=jnp.float32)   # fc_global.weight
    b1 = 0.1 * jax.random.normal(kb1, (H,), dtype=jnp.float32)     # fc_global.bias
    w2 = 0.1 * jax.random.normal(kw2, (T, H), dtype=jnp.float32)   # out.weight
    b2 = 0.1 * jax.random.normal(kb2, (T,), dtype=jnp.float32)     # out.bias

    params = prepare_params(w1, b1, w2, b2)

    # Pure-JAX reference.
    pooled_ref = jax.ops.segment_sum(x, batch, num_segments=G)
    h_ref = jnp.maximum(pooled_ref @ w1.T + b1, 0.0)
    out_ref = h_ref @ w2.T + b2

    # Config 1: default adaptive tile (single full-N slab at this size).
    out1, pooled1 = simple_mlp_graph_predictor(x, batch, params, num_graphs=G)
    out1 = jax.block_until_ready(out1)
    pooled1 = jax.block_until_ready(pooled1)
    assert jnp.allclose(pooled1, pooled_ref, atol=1e-4, rtol=1e-4)
    assert jnp.allclose(out1, out_ref, atol=1e-4, rtol=1e-4)

    # Config 2: tiny slab target forces multi-tile streaming, ragged-tail
    # masking and the dual-core split path.
    out2, pooled2 = simple_mlp_graph_predictor(x, batch, params, num_graphs=G,
                                               target_slab_bytes=8192)
    out2 = jax.block_until_ready(out2)
    pooled2 = jax.block_until_ready(pooled2)
    assert jnp.allclose(pooled2, pooled_ref, atol=1e-4, rtol=1e-4)
    assert jnp.allclose(out2, out_ref, atol=1e-4, rtol=1e-4)

    print("KERNEL_OK")
</pallas_src>

<mosaic_0001>
module attributes {stable_mosaic.version = 11 : i64} {
  func.func @_pool_kernel(%arg0: i32, %arg1: i32, %arg2: memref<2xi32, #tpu.memory_space<smem>>, %arg3: memref<1x1000xi32, #tpu.memory_space<vmem>>, %arg4: memref<1000x16xf32, #tpu.memory_space<vmem>>, %arg5: memref<1x8x16xf32, #tpu.memory_space<vmem>>) attributes {dimension_semantics = [#tpu.dimension_semantics<parallel>, #tpu.dimension_semantics<arbitrary>], iteration_bounds = array<i64: 2, 1>, scalar_prefetch = 1 : i64, scratch_operands = 0 : i64, tpu.core_type = #tpu.core_type<tc>, window_params = [{transform_indices = @transform_0, window_bounds = array<i64: 1, 1000>}, {transform_indices = @transform_1, window_bounds = array<i64: 1000, 16>}, {transform_indices = @transform_2, window_bounds = array<i64: 1, 8, 16>}]} {
    %c0_i32 = arith.constant 0 : i32
    %0 = arith.cmpi eq, %arg1, %c0_i32 : i32
    %1 = arith.extui %0 : i1 to i32
    %c0_i32_0 = arith.constant 0 : i32
    %2 = arith.cmpi ne, %1, %c0_i32_0 : i32
    scf.if %2 {
      %cst_13 = arith.constant 0.000000e+00 : f32
      %36 = vector.broadcast %cst_13 : f32 to vector<8x16xf32>
      %c0_14 = arith.constant 0 : index
      %c0_15 = arith.constant 0 : index
      %c0_16 = arith.constant 0 : index
      %37 = vector.load %arg5[%c0_14, %c0_15, %c0_16] : memref<1x8x16xf32, #tpu.memory_space<vmem>>, vector<1x8x16xf32>
      %38 = vector.shape_cast %37 : vector<1x8x16xf32> to vector<8x16xf32>
      %39 = vector.shape_cast %36 : vector<8x16xf32> to vector<1x8x16xf32>
      tpu.vector_store %arg5[%c0_14, %c0_15, %c0_16], %39 {strides = array<i32>} : memref<1x8x16xf32, #tpu.memory_space<vmem>>, vector<1x8x16xf32>,
    } else {
    }
    %c0 = arith.constant 0 : index
    %c0_1 = arith.constant 0 : index
    %3 = vector.load %arg3[%c0, %c0_1] : memref<1x1000xi32, #tpu.memory_space<vmem>>, vector<1x1000xi32>
    %4 = tpu.iota {dimensions = array<i32: 0>} : vector<8x1000xi32>
    %5 = vector.broadcast %3 : vector<1x1000xi32> to vector<8x1000xi32>
    %6 = arith.cmpi eq, %4, %5 : vector<8x1000xi32>
    %c0_2 = arith.constant 0 : index
    %c0_3 = arith.constant 0 : index
    %7 = vector.load %arg4[%c0_2, %c0_3] : memref<1000x16xf32, #tpu.memory_space<vmem>>, vector<1000x16xf32>
    %c1_i32 = arith.constant 1 : i32
    %8 = arith.muli %arg0, %c1_i32 : i32
    %9 = arith.addi %8, %arg1 : i32
    %c1000_i32 = arith.constant 1000 : i32
    %10 = arith.muli %9, %c1000_i32 : i32
    %11 = tpu.iota {dimensions = array<i32: 1>} : vector<1x1000xi32>
    %12 = vector.broadcast %10 : i32 to vector<1x1000xi32>
    %13 = arith.addi %11, %12 : vector<1x1000xi32>
    %c1000_i32_4 = arith.constant 1000 : i32
    %14 = vector.broadcast %c1000_i32_4 : i32 to vector<1x1000xi32>
    %15 = arith.cmpi slt, %13, %14 : vector<1x1000xi32>
    %16 = vector.broadcast %15 : vector<1x1000xi1> to vector<8x1000xi1>
    %17 = arith.andi %6, %16 : vector<8x1000xi1>
    %18 = tpu.iota {dimensions = array<i32: 0>} : vector<1000x1xi32>
    %19 = vector.broadcast %10 : i32 to vector<1000x1xi32>
    %20 = arith.addi %18, %19 : vector<1000x1xi32>
    %c1000_i32_5 = arith.constant 1000 : i32
    %21 = vector.broadcast %c1000_i32_5 : i32 to vector<1000x1xi32>
    %22 = arith.cmpi slt, %20, %21 : vector<1000x1xi32>
    %cst = arith.constant 0.000000e+00 : f32
    %23 = vector.shape_cast %22 : vector<1000x1xi1> to vector<1000x1xi1>
    %24 = vector.broadcast %23 : vector<1000x1xi1> to vector<1000x16xi1>
    %25 = vector.broadcast %cst : f32 to vector<1000x16xf32>
    %26 = arith.select %24, %7, %25 : vector<1000x16xi1>, vector<1000x16xf32>
    %27 = arith.extui %17 : vector<8x1000xi1> to vector<8x1000xi32>
    %28 = arith.sitofp %27 : vector<8x1000xi32> to vector<8x1000xf32>
    %c0_6 = arith.constant 0 : index
    %c0_7 = arith.constant 0 : index
    %c0_8 = arith.constant 0 : index
    %29 = vector.load %arg5[%c0_6, %c0_7, %c0_8] : memref<1x8x16xf32, #tpu.memory_space<vmem>>, vector<1x8x16xf32>
    %30 = vector.shape_cast %29 : vector<1x8x16xf32> to vector<8x16xf32>
    %cst_9 = arith.constant dense<0.000000e+00> : vector<8x16xf32>
    %31 = tpu.matmul %28, %26, %cst_9 {dimension_numbers = #tpu.dot_dimension_numbers<[1], [0], [0], [1], [0, 0, 1, 1], [], []>} : vector<8x1000xf32>, vector<1000x16xf32>, vector<8x16xf32> -> vector<8x16xf32>
    %32 = arith.addf %30, %31 : vector<8x16xf32>
    %c0_10 = arith.constant 0 : index
    %c0_11 = arith.constant 0 : index
    %c0_12 = arith.constant 0 : index
    %33 = vector.load %arg5[%c0_10, %c0_11, %c0_12] : memref<1x8x16xf32, #tpu.memory_space<vmem>>, vector<1x8x16xf32>
    %34 = vector.shape_cast %33 : vector<1x8x16xf32> to vector<8x16xf32>
    %35 = vector.shape_cast %32 : vector<8x16xf32> to vector<1x8x16xf32>
    tpu.vector_store %arg5[%c0_10, %c0_11, %c0_12], %35 {strides = array<i32>} : memref<1x8x16xf32, #tpu.memory_space<vmem>>, vector<1x8x16xf32>,
    return
  }
  func.func @transform_0(%arg0: i32, %arg1: i32, %arg2: memref<2xi32, #tpu.memory_space<smem>>) -> (i32, i32) {
    %c1_i32 = arith.constant 1 : i32
    %0 = arith.muli %arg0, %c1_i32 : i32
    %1 = arith.addi %0, %arg1 : i32
    %2 = arith.index_cast %1 : i32 to index
    %3 = memref.load %arg2[%2] : memref<2xi32, #tpu.memory_space<smem>>
    %c0_i32 = arith.constant 0 : i32
    %c0_i32_0 = arith.constant 0 : i32
    return %c0_i32, %3 : i32, i32
  }
  func.func @transform_1(%arg0: i32, %arg1: i32, %arg2: memref<2xi32, #tpu.memory_space<smem>>) -> (i32, i32) {
    %c1_i32 = arith.constant 1 : i32
    %0 = arith.muli %arg0, %c1_i32 : i32
    %1 = arith.addi %0, %arg1 : i32
    %2 = arith.index_cast %1 : i32 to index
    %3 = memref.load %arg2[%2] : memref<2xi32, #tpu.memory_space<smem>>
    %c0_i32 = arith.constant 0 : i32
    %c0_i32_0 = arith.constant 0 : i32
    return %3, %c0_i32 : i32, i32
  }
  func.func @transform_2(%arg0: i32, %arg1: i32, %arg2: memref<2xi32, #tpu.memory_space<smem>>) -> (i32, i32, i32) {
    %c0_i32 = arith.constant 0 : i32
    %c0_i32_0 = arith.constant 0 : i32
    %c0_i32_1 = arith.constant 0 : i32
    return %arg0, %c0_i32, %c0_i32_0 : i32, i32, i32
  }
}

module attributes {stable_mosaic.version = 11 : i64} {
  func.func @_combine_mlp_kernel(%arg0: memref<2x8x16xf32, #tpu.memory_space<vmem>>, %arg1: memref<16x32xf32, #tpu.memory_space<vmem>>, %arg2: memref<1x32xf32, #tpu.memory_space<vmem>>, %arg3: memref<32x4xf32, #tpu.memory_space<vmem>>, %arg4: memref<1x4xf32, #tpu.memory_space<vmem>>, %arg5: memref<8x4xf32, #tpu.memory_space<vmem>>, %arg6: memref<8x16xf32, #tpu.memory_space<vmem>>) attributes {dimension_semantics = [], scalar_prefetch = 0 : i64, scratch_operands = 0 : i64, tpu.core_type = #tpu.core_type<tc>} {
    %c0 = arith.constant 0 : index
    %c0_0 = arith.constant 0 : index
    %c0_1 = arith.constant 0 : index
    %0 = vector.load %arg0[%c0, %c0_0, %c0_1] : memref<2x8x16xf32, #tpu.memory_space<vmem>>, vector<1x8x16xf32>
    %1 = vector.shape_cast %0 : vector<1x8x16xf32> to vector<8x16xf32>
    %c1 = arith.constant 1 : index
    %c0_2 = arith.constant 0 : index
    %c0_3 = arith.constant 0 : index
    %2 = vector.load %arg0[%c1, %c0_2, %c0_3] : memref<2x8x16xf32, #tpu.memory_space<vmem>>, vector<1x8x16xf32>
    %3 = vector.shape_cast %2 : vector<1x8x16xf32> to vector<8x16xf32>
    %4 = arith.addf %1, %3 : vector<8x16xf32>
    %c0_4 = arith.constant 0 : index
    %c0_5 = arith.constant 0 : index
    %5 = vector.load %arg6[%c0_4, %c0_5] : memref<8x16xf32, #tpu.memory_space<vmem>>, vector<8x16xf32>
    tpu.vector_store %arg6[%c0_4, %c0_5], %4 {strides = array<i32>} : memref<8x16xf32, #tpu.memory_space<vmem>>, vector<8x16xf32>,
    %c0_6 = arith.constant 0 : index
    %c0_7 = arith.constant 0 : index
    %6 = vector.load %arg1[%c0_6, %c0_7] : memref<16x32xf32, #tpu.memory_space<vmem>>, vector<16x32xf32>
    %cst = arith.constant dense<0.000000e+00> : vector<8x32xf32>
    %7 = tpu.matmul %4, %6, %cst {dimension_numbers = #tpu.dot_dimension_numbers<[1], [0], [0], [1], [0, 0, 1, 1], [], []>} : vector<8x16xf32>, vector<16x32xf32>, vector<8x32xf32> -> vector<8x32xf32>
    %c0_8 = arith.constant 0 : index
    %c0_9 = arith.constant 0 : index
    %8 = vector.load %arg2[%c0_8, %c0_9] : memref<1x32xf32, #tpu.memory_space<vmem>>, vector<1x32xf32>
    %9 = vector.broadcast %8 : vector<1x32xf32> to vector<8x32xf32>
    %10 = arith.addf %7, %9 : vector<8x32xf32>
    %cst_10 = arith.constant 0.000000e+00 : f32
    %11 = vector.broadcast %cst_10 : f32 to vector<8x32xf32>
    %12 = arith.maximumf %10, %11 : vector<8x32xf32>
    %c0_11 = arith.constant 0 : index
    %c0_12 = arith.constant 0 : index
    %13 = vector.load %arg3[%c0_11, %c0_12] : memref<32x4xf32, #tpu.memory_space<vmem>>, vector<32x4xf32>
    %cst_13 = arith.constant dense<0.000000e+00> : vector<8x4xf32>
    %14 = tpu.matmul %12, %13, %cst_13 {dimension_numbers = #tpu.dot_dimension_numbers<[1], [0], [0], [1], [0, 0, 1, 1], [], []>} : vector<8x32xf32>, vector<32x4xf32>, vector<8x4xf32> -> vector<8x4xf32>
    %c0_14 = arith.constant 0 : index
    %c0_15 = arith.constant 0 : index
    %15 = vector.load %arg4[%c0_14, %c0_15] : memref<1x4xf32, #tpu.memory_space<vmem>>, vector<1x4xf32>
    %16 = vector.broadcast %15 : vector<1x4xf32> to vector<8x4xf32>
    %17 = arith.addf %14, %16 : vector<8x4xf32>
    %c0_16 = arith.constant 0 : index
    %c0_17 = arith.constant 0 : index
    %18 = vector.load %arg5[%c0_16, %c0_17] : memref<8x4xf32, #tpu.memory_space<vmem>>, vector<8x4xf32>
    tpu.vector_store %arg5[%c0_16, %c0_17], %17 {strides = array<i32>} : memref<8x4xf32, #tpu.memory_space<vmem>>, vector<8x4xf32>,
    return
  }
}

</mosaic_0001>

<llo_original>
// kernel: simple_mlp_graph_predictor.3
$region0: #{simple_mlp_graph_predictor.3}
  #allocation0 [shape = 'u32[]', space=smem, size = 0x4, offset = 0x4, fixed_abs, tag = 'smem constant byte address 0x4 - core index']
  #allocation1 [shape = 'u32[144,128]{1,0:T(1,128)}', space=vmem, size = 0x12000, scoped, tag = 'internal scratch']
  %s0 = inlined_call_operand.vmem [shape: f32[2,8,16], index: 0, kind: input, shape index: {}]
  %s1 = inlined_call_operand.vmem [shape: f32[16,32], index: 1, kind: input, shape index: {}]
  %s2 = inlined_call_operand.vmem [shape: f32[1,32], index: 2, kind: input, shape index: {}]
  %s3 = inlined_call_operand.vmem [shape: f32[32,4], index: 3, kind: input, shape index: {}]
  %s4 = inlined_call_operand.vmem [shape: f32[1,4], index: 4, kind: input, shape index: {}]
  %s5 = inlined_call_operand.vmem [shape: f32[8,4], index: 5, kind: output, shape index: {0}]
  %s6 = inlined_call_operand.hbm [shape: f32[8,16], index: 6, kind: output, shape index: {1}]
  %7 = xla_tuple %s5, %s6
  %s8 = sld [smem:[#allocation0]]
  $region38: #{simple_mlp_graph_predictor.3} parent=0
    _
  %s10 = ssub.s32 1, %s8
  %s11 = scalar_select 0, %s10, %s8
  $region1: #{simple_mlp_graph_predictor.3} parent=0
    #allocation2 [shape = 'u8[4096]{0}', space=vmem, size = 0x1000, scoped, tag = 'output window, operand 1, single buffered']
    #allocation3 [shape = 's32[1]{0}', space=sflag, size = 0x4, scoped, tag = 'scoped memory for simple_mlp_graph_predictor.3']
    %12 = vsyncpa [#allocation3], 0
    // Predicated region
    $region2: #{simple_mlp_graph_predictor.3} parent=1 // pred_check
      _
    $region3: #{simple_mlp_graph_predictor.3} parent=1 // pred_check_branch
      %14 = sbr.rel (0) target = $region5
    $region4: #{simple_mlp_graph_predictor.3} parent=1 // pred_region
      _
    $region5: #{simple_mlp_graph_predictor.3} parent=1 // pred_fallthru
      _
    // Predicated region
    $region6: #{simple_mlp_graph_predictor.3} parent=1 // pred_check
      _
    $region7: #{simple_mlp_graph_predictor.3} parent=1 // pred_check_branch
      %16 = sbr.rel (0) target = $region9
    $region8: #{simple_mlp_graph_predictor.3} parent=1 // pred_region
      _
    $region9: #{simple_mlp_graph_predictor.3} parent=1 // pred_fallthru
      _
    // Predicated region
    $region10: #{simple_mlp_graph_predictor.3} parent=1 // pred_check
      _
    $region11: #{simple_mlp_graph_predictor.3} parent=1 // pred_check_branch
      %18 = sbr.rel (0) target = $region13
    $region12: #{simple_mlp_graph_predictor.3} parent=1 // pred_region
      _
    $region13: #{simple_mlp_graph_predictor.3} parent=1 // pred_fallthru
      _
    // Predicated region
    $region14: #{simple_mlp_graph_predictor.3} parent=1 // pred_check
      _
    $region15: #{simple_mlp_graph_predictor.3} parent=1 // pred_check_branch
      %20 = sbr.rel (0) target = $region17
    $region16: #{simple_mlp_graph_predictor.3} parent=1 // pred_region
      _
    $region17: #{simple_mlp_graph_predictor.3} parent=1 // pred_fallthru
      _
    // Predicated region
    $region18: #{simple_mlp_graph_predictor.3} parent=1 // pred_check
      _
    $region19: #{simple_mlp_graph_predictor.3} parent=1 // pred_check_branch
      %22 = sbr.rel (0) target = $region21
    $region20: #{simple_mlp_graph_predictor.3} parent=1 // pred_region
      _
    $region21: #{simple_mlp_graph_predictor.3} parent=1 // pred_fallthru
      _
    %v23 = vld [vmem:[%s0] sm:$0xff]
    %s24 = scalar_lea.vmem %s0, 8
    %v25 = vld [vmem:[%s24] sm:$0xff]
    %v26 = vadd.f32 %v23, %v25
    %vm27 = vcmask 130048
    %28 = vst.msk [vmem:[#allocation2] sm:$0xff] %vm27, %v26
    %v29 = vld [vmem:[%s1] sm:$0xff]
    %v30 = vld [vmem:[%s1 + $0x8] sm:$0xff]
    %v31 = vld [vmem:[%s2] sm:$0x1]
    %v33 = vlaneseq
    %v34 = vshrl.u32 %v33, 7
    %v35 = vsub.s32 0, %v34
    %v36 = vrot.slane %v31, %v35
    %v39 = vsel %vm27, %v26, 0
    %41 = vmatprep.subr.mxu0 0.0
    %42 = vmatpush1.msra.mxu0 0.0
    %43 = vmatprep.subr.mxu0 0.0
    %44 = vmatpush1.msra.mxu0 0.0
    %45 = vmatprep.subr.mxu0 0.0
    %46 = vmatpush1.msra.mxu0 0.0
    %47 = vmatprep.subr.mxu0 0.0
    %48 = vmatpush1.msra.mxu0 0.0
    %49 = vmatprep.subr.mxu0 0.0
    %50 = vmatpush1.msra.mxu0 0.0
    %51 = vmatprep.subr.mxu0 0.0
    %52 = vmatpush1.msra.mxu0 0.0
    %53 = vmatprep.subr.mxu0 0.0
    %54 = vmatpush1.msra.mxu0 0.0
    %55 = vmatprep.subr.mxu0 0.0
    %56 = vmatpush1.msra.mxu0 0.0
    %57 = vmatprep.subr.mxu0 0.0
    %58 = vmatpush1.msra.mxu0 0.0
    %59 = vmatprep.subr.mxu0 0.0
    %60 = vmatpush1.msra.mxu0 0.0
    %61 = vmatprep.subr.mxu0 0.0
    %62 = vmatpush1.msra.mxu0 0.0
    %63 = vmatprep.subr.mxu0 0.0
    %64 = vmatpush1.msra.mxu0 0.0
    %65 = vmatprep.subr.mxu0 0.0
    %66 = vmatpush1.msra.mxu0 0.0
    %67 = vmatprep.subr.mxu0 0.0
    %68 = vmatpush1.msra.mxu0 0.0
    %69 = vmatprep.subr.mxu0 0.0
    %70 = vmatpush1.msra.mxu0 %v30
    %71 = vmatprep.subr.mxu0 0.0
    %72 = vmatpush1.msra.mxu0 %v29
    %73 = vmatprep.subr.mxu0 0.0
    %74 = vmatpush2.msra.mxu0 0.0
    %75 = vmatprep.subr.mxu0 0.0
    %76 = vmatpush2.msra.mxu0 0.0
    %77 = vmatprep.subr.mxu0 0.0
    %78 = vmatpush2.msra.mxu0 0.0
    %79 = vmatprep.subr.mxu0 0.0
    %80 = vmatpush2.msra.mxu0 0.0
    %81 = vmatprep.subr.mxu0 0.0
    %82 = vmatpush2.msra.mxu0 0.0
    %83 = vmatprep.subr.mxu0 0.0
    %84 = vmatpush2.msra.mxu0 0.0
    %85 = vmatprep.subr.mxu0 0.0
    %86 = vmatpush2.msra.mxu0 0.0
    %87 = vmatprep.subr.mxu0 0.0
    %88 = vmatpush2.msra.mxu0 0.0
    %89 = vmatprep.subr.mxu0 0.0
    %90 = vmatpush2.msra.mxu0 0.0
    %91 = vmatprep.subr.mxu0 0.0
    %92 = vmatpush2.msra.mxu0 0.0
    %93 = vmatprep.subr.mxu0 0.0
    %94 = vmatpush2.msra.mxu0 0.0
    %95 = vmatprep.subr.mxu0 0.0
    %96 = vmatpush2.msra.mxu0 0.0
    %97 = vmatprep.subr.mxu0 0.0
    %98 = vmatpush2.msra.mxu0 0.0
    %99 = vmatprep.subr.mxu0 0.0
    %100 = vmatpush2.msra.mxu0 0.0
    %101 = vmatprep.subr.mxu0 0.0
    %102 = vmatpush2.msra.mxu0 0.0
    %103 = vmatprep.subr.mxu0 0.0
    %104 = vmatpush2.msra.mxu0 0.0
    %105 = vmatprep.mubr.f32.mxu0 0.0
    %106 = vmatmul.mubr.f32.gmra.mxu0 %v39
    %v107 = vpop.f32.mrf.mxu0
    %v108 = vadd.f32 %v36, %v107
    %v109 = vpop.f32.mrf.mxu0
    %110 = vdwg.mxu0
    %v111 = vmax.f32 %v108, 0.0
    %v112 = vld [vmem:[%s3] sm:$0xff]
    %v113 = vld [vmem:[%s3 + $0x8] sm:$0xff]
    %v114 = vld [vmem:[%s3 + $0x10] sm:$0xff]
    %v115 = vld [vmem:[%s3 + $0x18] sm:$0xff]
    %v116 = vld [vmem:[%s4] sm:$0x1]
    %v118 = vlaneseq
    %v119 = vshrl.u32 %v118, 7
    %v120 = vsub.s32 0, %v119
    %v121 = vrot.slane %v116, %v120
    %vm123 = vcmask 261120
    %v125 = vsel %vm123, %v111, 0
    %127 = vmatprep.subr.mxu0 0.0
    %128 = vmatpush1.msra.mxu0 0.0
    %129 = vmatprep.subr.mxu0 0.0
    %130 = vmatpush1.msra.mxu0 0.0
    %131 = vmatprep.subr.mxu0 0.0
    %132 = vmatpush1.msra.mxu0 0.0
    %133 = vmatprep.subr.mxu0 0.0
    %134 = vmatpush1.msra.mxu0 0.0
    %135 = vmatprep.subr.mxu0 0.0
    %136 = vmatpush1.msra.mxu0 0.0
    %137 = vmatprep.subr.mxu0 0.0
    %138 = vmatpush1.msra.mxu0 0.0
    %139 = vmatprep.subr.mxu0 0.0
    %140 = vmatpush1.msra.mxu0 0.0
    %141 = vmatprep.subr.mxu0 0.0
    %142 = vmatpush1.msra.mxu0 0.0
    %143 = vmatprep.subr.mxu0 0.0
    %144 = vmatpush1.msra.mxu0 0.0
    %145 = vmatprep.subr.mxu0 0.0
    %146 = vmatpush1.msra.mxu0 0.0
    %147 = vmatprep.subr.mxu0 0.0
    %148 = vmatpush1.msra.mxu0 0.0
    %149 = vmatprep.subr.mxu0 0.0
    %150 = vmatpush1.msra.mxu0 0.0
    %151 = vmatprep.subr.mxu0 0.0
    %152 = vmatpush1.msra.mxu0 %v115
    %153 = vmatprep.subr.mxu0 0.0
    %154 = vmatpush1.msra.mxu0 %v114
    %155 = vmatprep.subr.mxu0 0.0
    %156 = vmatpush1.msra.mxu0 %v113
    %157 = vmatprep.subr.mxu0 0.0
    %158 = vmatpush1.msra.mxu0 %v112
    %159 = vmatprep.subr.mxu0 0.0
    %160 = vmatpush2.msra.mxu0 0.0
    %161 = vmatprep.subr.mxu0 0.0
    %162 = vmatpush2.msra.mxu0 0.0
    %163 = vmatprep.subr.mxu0 0.0
    %164 = vmatpush2.msra.mxu0 0.0
    %165 = vmatprep.subr.mxu0 0.0
    %166 = vmatpush2.msra.mxu0 0.0
    %167 = vmatprep.subr.mxu0 0.0
    %168 = vmatpush2.msra.mxu0 0.0
    %169 = vmatprep.subr.mxu0 0.0
    %170 = vmatpush2.msra.mxu0 0.0
    %171 = vmatprep.subr.mxu0 0.0
    %172 = vmatpush2.msra.mxu0 0.0
    %173 = vmatprep.subr.mxu0 0.0
    %174 = vmatpush2.msra.mxu0 0.0
    %175 = vmatprep.subr.mxu0 0.0
    %176 = vmatpush2.msra.mxu0 0.0
    %177 = vmatprep.subr.mxu0 0.0
    %178 = vmatpush2.msra.mxu0 0.0
    %179 = vmatprep.subr.mxu0 0.0
    %180 = vmatpush2.msra.mxu0 0.0
    %181 = vmatprep.subr.mxu0 0.0
    %182 = vmatpush2.msra.mxu0 0.0
    %183 = vmatprep.subr.mxu0 0.0
    %184 = vmatpush2.msra.mxu0 0.0
    %185 = vmatprep.subr.mxu0 0.0
    %186 = vmatpush2.msra.mxu0 0.0
    %187 = vmatprep.subr.mxu0 0.0
    %188 = vmatpush2.msra.mxu0 0.0
    %189 = vmatprep.subr.mxu0 0.0
    %190 = vmatpush2.msra.mxu0 0.0
    %191 = vmatprep.mubr.f32.mxu0 0.0
    %192 = vmatmul.mubr.f32.gmra.mxu0 %v125
    %v193 = vpop.f32.mrf.mxu0
    %v194 = vadd.f32 %v121, %v193
    %v195 = vpop.f32.mrf.mxu0
    %196 = vdwg.mxu0
    %vm197 = vcmask 31744
    %198 = vst.msk [vmem:[%s5] sm:$0xff] %vm197, %v194
    // Predicated region
    $region22: #{simple_mlp_graph_predictor.3} parent=1 // pred_check
      _
    $region23: #{simple_mlp_graph_predictor.3} parent=1 // pred_check_branch
      %200 = sbr.rel (0) target = $region25
    $region24: #{simple_mlp_graph_predictor.3} parent=1 // pred_region
      _
    $region25: #{simple_mlp_graph_predictor.3} parent=1 // pred_fallthru
      _
    // Predicated region
    $region26: #{simple_mlp_graph_predictor.3} parent=1 // pred_check
      _
    $region27: #{simple_mlp_graph_predictor.3} parent=1 // pred_check_branch
      %202 = sbr.rel (0) target = $region29
    $region28: #{simple_mlp_graph_predictor.3} parent=1 // pred_region
      %s204 = ssub.s32 128, 128
      %205 = vsyncadd [#allocation3], %s204
      %s207 = sshll.u32 [#allocation2], 4
      %s208 = int_to_ptr.vmem [resolvable:$true] %s207
      %210 = dma.vmem_to_hbm [thread:$0]  %s208, 128, %s6, [#allocation3]
    $region29: #{simple_mlp_graph_predictor.3} parent=1 // pred_fallthru
      _
    // Predicated region
    $region30: #{simple_mlp_graph_predictor.3} parent=1 // pred_check
      _
    $region31: #{simple_mlp_graph_predictor.3} parent=1 // pred_check_branch
      %212 = sbr.rel (0) target = $region33
    $region32: #{simple_mlp_graph_predictor.3} parent=1 // pred_region
      _
    $region33: #{simple_mlp_graph_predictor.3} parent=1 // pred_fallthru
      _
    // Predicated region
    $region34: #{simple_mlp_graph_predictor.3} parent=1 // pred_check
      _
    $region35: #{simple_mlp_graph_predictor.3} parent=1 // pred_check_branch
      %214 = sbr.rel (0) target = $region37
    $region36: #{simple_mlp_graph_predictor.3} parent=1 // pred_region
      %215 = dma.done [#allocation3], 128
    $region37: #{simple_mlp_graph_predictor.3} parent=1 // pred_fallthru
      _
    %216 = vsyncpa [#allocation3], 1

// kernel: simple_mlp_graph_predictor.2
$region0: #{simple_mlp_graph_predictor.2}
  #allocation0 [shape = 'u32[]', space=smem, size = 0x4, offset = 0x4, fixed_abs, tag = 'smem constant byte address 0x4 - core index']
  #allocation1 [shape = 'u32[144,128]{1,0:T(1,128)}', space=vmem, size = 0x12000, scoped, tag = 'internal scratch']
  #allocation2 [shape = 's32[1]{0}', space=sflag, size = 0x4, scoped, tag = 'scoped memory for simple_mlp_graph_predictor.2']
  #allocation3 [shape = 'u8[512]{0}', space=smem, size = 0x200, scoped, tag = 'prefetched SMEM operand 0']
  %s0 = inlined_call_operand.vmem [shape: s32[2], index: 0, kind: input, shape index: {}]
  %s1 = inlined_call_operand.vmem [shape: s32[1,1000], index: 1, kind: input, shape index: {}]
  %s2 = inlined_call_operand.vmem [shape: f32[1000,16], index: 2, kind: input, shape index: {}]
  %s3 = inlined_call_operand.vmem [shape: f32[2,8,16], index: 3, kind: output, shape index: {}]
  %s4 = sld [smem:[#allocation0]]
  $region45: #{simple_mlp_graph_predictor.2} parent=0
    _
  %s6 = ssub.s32 1, %s4
  %s7 = scalar_select 0, %s6, %s4
  %s8 = sshll.u32 %s0, 4
  %s9 = int_to_ptr.vmem [resolvable:$true] %s8
  %11 = dma.vmem_to_smem %s9, 16, [#allocation3], [#allocation2]
  %12 = dma.done [#allocation2], 16
  %13 = sfence
  loop: start=0, step=1, limit=4
  $region2: #{simple_mlp_graph_predictor.2} parent=0 // loop_pre_header
    _
  $region3: #{simple_mlp_graph_predictor.2} parent=0 // loop_header
    %s15 = sphi 0, %s19
    %p16 = scmp.ge.s32.totalorder %s15, 4
    %s22 = sphi 0, %s34
    %s23 = sphi 0, %s30
    %s24 = sphi 0, %s22
    %s25 = sphi 0, %s23
    %s26 = sphi 0, %s24
    %s27 = sphi 0, %s25
    %s41 = sphi 0, %s43
    %s44 = sphi 0, %s41
    %s45 = sphi 0, %s44
    %s61 = sphi 0, %s45
    %s71 = sphi 0, %s73
    %s74 = sphi 0, %s71
    %s75 = sphi 0, %s74
    %s91 = sphi 0, %s75
    %s97 = sphi 0, %s99
    %s100 = sphi 0, %s97
    %s101 = sphi 0, %s100
    %s117 = sphi 0, %s101
  $region4: #{simple_mlp_graph_predictor.2} parent=0 // loop_header_branch
    %18 = sbr.rel (%p16) target = $region8
  $region5: #{simple_mlp_graph_predictor.2} parent=0 // loop_body
    %s20 = ssub.s32 %s15, 1
    %s21 = ssub.s32 %s15, 2
    %s28 = sadd.s32 1, %s23
    %p29 = scmp.ge.s32.totalorder %s28, 1
    %s30 = scalar_select %p29, 0, %s28
    %s31 = sadd.s32 1, %s22
    %s32 = scalar_select %p29, %s31, %s22
    %p33 = scmp.ge.s32.totalorder %s32, 2
    %s34 = scalar_select %p33, 0, %s32
    %s35 = sadd.s32 %s22, %s23
    %s36 = sld [smem:[#allocation3 + %s35]]
    %s37 = sadd.s32 %s34, %s30
    %s38 = sld [smem:[#allocation3 + %s37]]
    %s39 = ssub.s32 %s36, %s38
    %p40 = scmp.eq.s32.totalorder %s39, 0
    %s42 = sadd.s32 %s41, 1
    %s43 = scalar_select %p40, %s41, %s42
    %p46 = pneg %p40
    %p47 = scmp.eq.s32.totalorder %s15, 1
    %p48 = por %p46, %p47
    %p49 = scmp.ne.s32.totalorder %s41, %s44
    %p50 = scmp.eq.s32.totalorder %s15, 0
    %p51 = por %p49, %p50
    %p52 = scmp.ne.s32.totalorder %s41, %s44
    %p53 = scmp.eq.s32.totalorder %s20, 1
    %p54 = por %p52, %p53
    %p55 = scmp.ne.s32.totalorder %s44, %s45
    %p56 = scmp.eq.s32.totalorder %s20, 0
    %p57 = por %p55, %p56
    %p58 = scmp.ne.s32.totalorder %s44, %s45
    %p59 = scmp.eq.s32.totalorder %s21, 1
    %p60 = por %p58, %p59
    %p62 = scmp.ne.s32.totalorder %s45, %s61
    %p63 = scmp.eq.s32.totalorder %s21, 0
    %p64 = por %p62, %p63
    %s65 = sadd.s32 %s22, %s23
    %s66 = sld [smem:[#allocation3 + %s65]]
    %s67 = sadd.s32 %s34, %s30
    %s68 = sld [smem:[#allocation3 + %s67]]
    %s69 = ssub.s32 %s66, %s68
    %p70 = scmp.eq.s32.totalorder %s69, 0
    %s72 = sadd.s32 %s71, 1
    %s73 = scalar_select %p70, %s71, %s72
    %p76 = pneg %p70
    %p77 = scmp.eq.s32.totalorder %s15, 1
    %p78 = por %p76, %p77
    %p79 = scmp.ne.s32.totalorder %s71, %s74
    %p80 = scmp.eq.s32.totalorder %s15, 0
    %p81 = por %p79, %p80
    %p82 = scmp.ne.s32.totalorder %s71, %s74
    %p83 = scmp.eq.s32.totalorder %s20, 1
    %p84 = por %p82, %p83
    %p85 = scmp.ne.s32.totalorder %s74, %s75
    %p86 = scmp.eq.s32.totalorder %s20, 0
    %p87 = por %p85, %p86
    %p88 = scmp.ne.s32.totalorder %s74, %s75
    %p89 = scmp.eq.s32.totalorder %s21, 1
    %p90 = por %p88, %p89
    %p92 = scmp.ne.s32.totalorder %s75, %s91
    %p93 = scmp.eq.s32.totalorder %s21, 0
    %p94 = por %p92, %p93
    %s95 = ssub.s32 %s22, %s34
    %p96 = scmp.eq.s32.totalorder %s95, 0
    %s98 = sadd.s32 %s97, 1
    %s99 = scalar_select %p96, %s97, %s98
    %p102 = pneg %p96
    %p103 = scmp.eq.s32.totalorder %s15, 1
    %p104 = por %p102, %p103
    %p105 = scmp.ne.s32.totalorder %s97, %s100
    %p106 = scmp.eq.s32.totalorder %s15, 0
    %p107 = por %p105, %p106
    %p108 = scmp.ne.s32.totalorder %s97, %s100
    %p109 = scmp.eq.s32.totalorder %s20, 1
    %p110 = por %p108, %p109
    %p111 = scmp.ne.s32.totalorder %s100, %s101
    %p112 = scmp.eq.s32.totalorder %s20, 0
    %p113 = por %p111, %p112
    %p114 = scmp.ne.s32.totalorder %s100, %s101
    %p115 = scmp.eq.s32.totalorder %s21, 1
    %p116 = por %p114, %p115
    %p118 = scmp.ne.s32.totalorder %s101, %s117
    %p119 = scmp.eq.s32.totalorder %s21, 0
    %p120 = por %p118, %p119
    %p121 = scmp.le.s32.totalorder 1, %s15
    %p122 = scmp.lt.s32.totalorder %s15, 3
    %p123 = pnand %p121, %p122
    %p124 = pneg %p123
    // Predicated region
    $region9: #{simple_mlp_graph_predictor.2} parent=5 // pred_check
      _
    $region10: #{simple_mlp_graph_predictor.2} parent=5 // pred_check_branch
      %126 = sbr.rel (%p123) target = $region12
    $region11: #{simple_mlp_graph_predictor.2} parent=5 // pred_region
      %s127 = ssub.s32 %s15, 1
    $region12: #{simple_mlp_graph_predictor.2} parent=5 // pred_fallthru
      _
    %p128 = scmp.lt.s32.totalorder %s15, 2
    // Predicated region
    $region13: #{simple_mlp_graph_predictor.2} parent=5 // pred_check
      %p129 = pneg %p128
    $region14: #{simple_mlp_graph_predictor.2} parent=5 // pred_check_branch
      %131 = sbr.rel (%p129) target = $region16
    $region15: #{simple_mlp_graph_predictor.2} parent=5 // pred_region
      // Predicated region
      $region17: #{simple_mlp_graph_predictor.2} parent=15 // pred_check
        %p132 = pneg %p51
      $region18: #{simple_mlp_graph_predictor.2} parent=15 // pred_check_branch
        %134 = sbr.rel (%p132) target = $region20
      $region19: #{simple_mlp_graph_predictor.2} parent=15 // pred_region
        %s135 = sadd.s32 %s22, %s23
        %s136 = sld [smem:[#allocation3 + %s135]]
        %s137 = smul.u32 8, %s136
        %p138 = scmp.lt.s32.totalorder %s137, 7
        %s139 = scalar_select %p138, %s137, 7
        %s140 = scalar_lea.vmem %s1, %s139
        %s141 = sadd.s32 %s22, %s23
        %s142 = sld [smem:[#allocation3 + %s141]]
        %s143 = smul.u32 8, %s142
      $region20: #{simple_mlp_graph_predictor.2} parent=15 // pred_fallthru
        _
      // Predicated region
      $region21: #{simple_mlp_graph_predictor.2} parent=15 // pred_check
        %p144 = pneg %p81
      $region22: #{simple_mlp_graph_predictor.2} parent=15 // pred_check_branch
        %146 = sbr.rel (%p144) target = $region24
      $region23: #{simple_mlp_graph_predictor.2} parent=15 // pred_region
        %s147 = sadd.s32 %s22, %s23
        %s148 = sld [smem:[#allocation3 + %s147]]
        %s149 = smul.u32 125, %s148
        %p150 = scmp.lt.s32.totalorder %s149, 124
        %s151 = scalar_select %p150, %s149, 124
        %s152 = smul.addr %s151, 8
        %s153 = scalar_lea.vmem %s2, %s152
        %s154 = sadd.s32 %s22, %s23
        %s155 = sld [smem:[#allocation3 + %s154]]
        %s156 = smul.u32 125, %s155
      $region24: #{simple_mlp_graph_predictor.2} parent=15 // pred_fallthru
        _
    $region16: #{simple_mlp_graph_predictor.2} parent=5 // pred_fallthru
      _
    %p157 = scmp.le.s32.totalorder 1, %s15
    %p158 = scmp.lt.s32.totalorder %s15, 3
    %p159 = pnand %p157, %p158
    %p160 = pneg %p159
    // Predicated region
    $region25: #{simple_mlp_graph_predictor.2} parent=5 // pred_check
      _
    $region26: #{simple_mlp_graph_predictor.2} parent=5 // pred_check_branch
      %162 = sbr.rel (%p159) target = $region28
    $region27: #{simple_mlp_graph_predictor.2} parent=5 // pred_region
      %s163 = ssub.s32 %s15, 1
      %s164 = sadd.s32 %s24, %s25
      %s165 = sld [smem:[#allocation3 + %s164]]
      %s166 = smul.u32 8, %s165
      %p167 = scmp.lt.s32.totalorder %s166, 7
      %s168 = scalar_select %p167, %s166, 7
      %s169 = scalar_lea.vmem %s1, %s168
      %p170 = pneg %p57
      %p171 = pneg %p54
      %s172 = sadd.s32 %s24, %s25
      %s173 = sld [smem:[#allocation3 + %s172]]
      %s174 = smul.u32 125, %s173
      %p175 = scmp.lt.s32.totalorder %s174, 124
      %s176 = scalar_select %p175, %s174, 124
      %s177 = smul.addr %s176, 8
      %s178 = scalar_lea.vmem %s2, %s177
      %p179 = pneg %p87
      %p180 = pneg %p84
      %p181 = pneg %p113
      %p182 = pneg %p110
      %p183 = scmp.lt.s32.totalorder %s24, 1
      %s184 = scalar_select %p183, %s24, 1
      %s185 = smul.addr %s184, 8
      %s186 = scalar_lea.vmem %s3, %s185
      %s187 = sadd.s32 %s24, %s25
      %s188 = sld [smem:[#allocation3 + %s187]]
      %s189 = smul.u32 8, %s188
      %p190 = scmp.lt.s32.totalorder %s189, 7
      %s191 = scalar_select %p190, %s189, 7
      %s192 = scalar_lea.vmem %s1, %s191
      %s193 = sadd.s32 %s24, %s25
      %s194 = sld [smem:[#allocation3 + %s193]]
      %s195 = smul.u32 8, %s194
      %s196 = sadd.s32 %s24, %s25
      %s197 = sld [smem:[#allocation3 + %s196]]
      %s198 = smul.u32 125, %s197
      %p199 = scmp.lt.s32.totalorder %s198, 124
      %s200 = scalar_select %p199, %s198, 124
      %s201 = smul.addr %s200, 8
      %s202 = scalar_lea.vmem %s2, %s201
      %s203 = sadd.s32 %s24, %s25
      %s204 = sld [smem:[#allocation3 + %s203]]
      %s205 = smul.u32 125, %s204
      %p206 = scmp.lt.s32.totalorder %s24, 1
      %s207 = scalar_select %p206, %s24, 1
      %s208 = smul.addr %s207, 8
      %s209 = scalar_lea.vmem %s3, %s208
      %p210 = scmp.eq.s32.totalorder %s25, 0
      // Predicated region
      $region29: #{simple_mlp_graph_predictor.2} parent=27 // pred_check
        %p211 = pneg %p210
      $region30: #{simple_mlp_graph_predictor.2} parent=27 // pred_check_branch
        %213 = sbr.rel (%p211) target = $region32
      $region31: #{simple_mlp_graph_predictor.2} parent=27 // pred_region
        %vm214 = vcmask 130048
        %215 = vst.msk [vmem:[%s209] sm:$0xff] %vm214, 0.0
      $region32: #{simple_mlp_graph_predictor.2} parent=27 // pred_fallthru
        _
      %v216 = vld [vmem:[%s192] sm:$0xff]
      %v217 = vlaneseq
      %v218 = vshrl.u32 %v217, 7
      %v219 = vlaneseq
      %v220 = vshrl.u32 %v219, 7
      %v221 = vsub.s32 0, %v220
      %v222 = vrot.slane %v216, %v221
      %v223 = vlaneseq
      %v224 = vshrl.u32 %v223, 7
      %v225 = vsub.s32 1, %v224
      %v226 = vrot.slane %v216, %v225
      %v227 = vlaneseq
      %v228 = vshrl.u32 %v227, 7
      %v229 = vsub.s32 2, %v228
      %v230 = vrot.slane %v216, %v229
      %v231 = vlaneseq
      %v232 = vshrl.u32 %v231, 7
      %v233 = vsub.s32 3, %v232
      %v234 = vrot.slane %v216, %v233
      %v235 = vlaneseq
      %v236 = vshrl.u32 %v235, 7
      %v237 = vsub.s32 4, %v236
      %v238 = vrot.slane %v216, %v237
      %v239 = vlaneseq
      %v240 = vshrl.u32 %v239, 7
      %v241 = vsub.s32 5, %v240
      %v242 = vrot.slane %v216, %v241
      %v243 = vlaneseq
      %v244 = vshrl.u32 %v243, 7
      %v245 = vsub.s32 6, %v244
      %v246 = vrot.slane %v216, %v245
      %v247 = vlaneseq
      %v248 = vshrl.u32 %v247, 7
      %v249 = vsub.s32 7, %v248
      %v250 = vrot.slane %v216, %v249
      %vm251 = vcmp.eq.s32.totalorder %v218, %v222
      %vm252 = vcmp.eq.s32.totalorder %v218, %v226
      %vm253 = vcmp.eq.s32.totalorder %v218, %v230
      %vm254 = vcmp.eq.s32.totalorder %v218, %v234
      %vm255 = vcmp.eq.s32.totalorder %v218, %v238
      %vm256 = vcmp.eq.s32.totalorder %v218, %v242
      %vm257 = vcmp.eq.s32.totalorder %v218, %v246
      %vm258 = vcmp.eq.s32.totalorder %v218, %v250
      %v259 = vld [vmem:[%s202] sm:$0xff]
      %v260 = vld [vmem:[%s202 + $0x8] sm:$0xff]
      %v261 = vld [vmem:[%s202 + $0x10] sm:$0xff]
      %v262 = vld [vmem:[%s202 + $0x18] sm:$0xff]
      %v263 = vld [vmem:[%s202 + $0x20] sm:$0xff]
      %v264 = vld [vmem:[%s202 + $0x28] sm:$0xff]
      %v265 = vld [vmem:[%s202 + $0x30] sm:$0xff]
      %v266 = vld [vmem:[%s202 + $0x38] sm:$0xff]
      %v267 = vld [vmem:[%s202 + $0x40] sm:$0xff]
      %v268 = vld [vmem:[%s202 + $0x48] sm:$0xff]
      %v269 = vld [vmem:[%s202 + $0x50] sm:$0xff]
      %v270 = vld [vmem:[%s202 + $0x58] sm:$0xff]
      %v271 = vld [vmem:[%s202 + $0x60] sm:$0xff]
      %v272 = vld [vmem:[%s202 + $0x68] sm:$0xff]
      %v273 = vld [vmem:[%s202 + $0x70] sm:$0xff]
      %v274 = vld [vmem:[%s202 + $0x78] sm:$0xff]
      %v275 = vld [vmem:[%s202 + $0x80] sm:$0xff]
      %v276 = vld [vmem:[%s202 + $0x88] sm:$0xff]
      %v277 = vld [vmem:[%s202 + $0x90] sm:$0xff]
      %v278 = vld [vmem:[%s202 + $0x98] sm:$0xff]
      %v279 = vld [vmem:[%s202 + $0xa0] sm:$0xff]
      %v280 = vld [vmem:[%s202 + $0xa8] sm:$0xff]
      %v281 = vld [vmem:[%s202 + $0xb0] sm:$0xff]
      %v282 = vld [vmem:[%s202 + $0xb8] sm:$0xff]
      %v283 = vld [vmem:[%s202 + $0xc0] sm:$0xff]
      %v284 = vld [vmem:[%s202 + $0xc8] sm:$0xff]
      %v285 = vld [vmem:[%s202 + $0xd0] sm:$0xff]
      %v286 = vld [vmem:[%s202 + $0xd8] sm:$0xff]
      %v287 = vld [vmem:[%s202 + $0xe0] sm:$0xff]
      %v288 = vld [vmem:[%s202 + $0xe8] sm:$0xff]
      %v289 = vld [vmem:[%s202 + $0xf0] sm:$0xff]
      %v290 = vld [vmem:[%s202 + $0xf8] sm:$0xff]
      %v291 = vld [vmem:[%s202 + $0x100] sm:$0xff]
      %v292 = vld [vmem:[%s202 + $0x108] sm:$0xff]
      %v293 = vld [vmem:[%s202 + $0x110] sm:$0xff]
      %v294 = vld [vmem:[%s202 + $0x118] sm:$0xff]
      %v295 = vld [vmem:[%s202 + $0x120] sm:$0xff]
      %v296 = vld [vmem:[%s202 + $0x128] sm:$0xff]
      %v297 = vld [vmem:[%s202 + $0x130] sm:$0xff]
      %v298 = vld [vmem:[%s202 + $0x138] sm:$0xff]
      %v299 = vld [vmem:[%s202 + $0x140] sm:$0xff]
      %v300 = vld [vmem:[%s202 + $0x148] sm:$0xff]
      %v301 = vld [vmem:[%s202 + $0x150] sm:$0xff]
      %v302 = vld [vmem:[%s202 + $0x158] sm:$0xff]
      %v303 = vld [vmem:[%s202 + $0x160] sm:$0xff]
      %v304 = vld [vmem:[%s202 + $0x168] sm:$0xff]
      %v305 = vld [vmem:[%s202 + $0x170] sm:$0xff]
      %v306 = vld [vmem:[%s202 + $0x178] sm:$0xff]
      %v307 = vld [vmem:[%s202 + $0x180] sm:$0xff]
      %v308 = vld [vmem:[%s202 + $0x188] sm:$0xff]
      %v309 = vld [vmem:[%s202 + $0x190] sm:$0xff]
      %v310 = vld [vmem:[%s202 + $0x198] sm:$0xff]
      %v311 = vld [vmem:[%s202 + $0x1a0] sm:$0xff]
      %v312 = vld [vmem:[%s202 + $0x1a8] sm:$0xff]
      %v313 = vld [vmem:[%s202 + $0x1b0] sm:$0xff]
      %v314 = vld [vmem:[%s202 + $0x1b8] sm:$0xff]
      %v315 = vld [vmem:[%s202 + $0x1c0] sm:$0xff]
      %v316 = vld [vmem:[%s202 + $0x1c8] sm:$0xff]
      %v317 = vld [vmem:[%s202 + $0x1d0] sm:$0xff]
      %v318 = vld [vmem:[%s202 + $0x1d8] sm:$0xff]
      %v319 = vld [vmem:[%s202 + $0x1e0] sm:$0xff]
      %v320 = vld [vmem:[%s202 + $0x1e8] sm:$0xff]
      %v321 = vld [vmem:[%s202 + $0x1f0] sm:$0xff]
      %v322 = vld [vmem:[%s202 + $0x1f8] sm:$0xff]
      %v323 = vld [vmem:[%s202 + $0x200] sm:$0xff]
      %v324 = vld [vmem:[%s202 + $0x208] sm:$0xff]
      %v325 = vld [vmem:[%s202 + $0x210] sm:$0xff]
      %v326 = vld [vmem:[%s202 + $0x218] sm:$0xff]
      %v327 = vld [vmem:[%s202 + $0x220] sm:$0xff]
      %v328 = vld [vmem:[%s202 + $0x228] sm:$0xff]
      %v329 = vld [vmem:[%s202 + $0x230] sm:$0xff]
      %v330 = vld [vmem:[%s202 + $0x238] sm:$0xff]
      %v331 = vld [vmem:[%s202 + $0x240] sm:$0xff]
      %v332 = vld [vmem:[%s202 + $0x248] sm:$0xff]
      %v333 = vld [vmem:[%s202 + $0x250] sm:$0xff]
      %v334 = vld [vmem:[%s202 + $0x258] sm:$0xff]
      %v335 = vld [vmem:[%s202 + $0x260] sm:$0xff]
      %v336 = vld [vmem:[%s202 + $0x268] sm:$0xff]
      %v337 = vld [vmem:[%s202 + $0x270] sm:$0xff]
      %v338 = vld [vmem:[%s202 + $0x278] sm:$0xff]
      %v339 = vld [vmem:[%s202 + $0x280] sm:$0xff]
      %v340 = vld [vmem:[%s202 + $0x288] sm:$0xff]
      %v341 = vld [vmem:[%s202 + $0x290] sm:$0xff]
      %v342 = vld [vmem:[%s202 + $0x298] sm:$0xff]
      %v343 = vld [vmem:[%s202 + $0x2a0] sm:$0xff]
      %v344 = vld [vmem:[%s202 + $0x2a8] sm:$0xff]
      %v345 = vld [vmem:[%s202 + $0x2b0] sm:$0xff]
      %v346 = vld [vmem:[%s202 + $0x2b8] sm:$0xff]
      %v347 = vld [vmem:[%s202 + $0x2c0] sm:$0xff]
      %v348 = vld [vmem:[%s202 + $0x2c8] sm:$0xff]
      %v349 = vld [vmem:[%s202 + $0x2d0] sm:$0xff]
      %v350 = vld [vmem:[%s202 + $0x2d8] sm:$0xff]
      %v351 = vld [vmem:[%s202 + $0x2e0] sm:$0xff]
      %v352 = vld [vmem:[%s202 + $0x2e8] sm:$0xff]
      %v353 = vld [vmem:[%s202 + $0x2f0] sm:$0xff]
      %v354 = vld [vmem:[%s202 + $0x2f8] sm:$0xff]
      %v355 = vld [vmem:[%s202 + $0x300] sm:$0xff]
      %v356 = vld [vmem:[%s202 + $0x308] sm:$0xff]
      %v357 = vld [vmem:[%s202 + $0x310] sm:$0xff]
      %v358 = vld [vmem:[%s202 + $0x318] sm:$0xff]
      %v359 = vld [vmem:[%s202 + $0x320] sm:$0xff]
      %v360 = vld [vmem:[%s202 + $0x328] sm:$0xff]
      %v361 = vld [vmem:[%s202 + $0x330] sm:$0xff]
      %v362 = vld [vmem:[%s202 + $0x338] sm:$0xff]
      %v363 = vld [vmem:[%s202 + $0x340] sm:$0xff]
      %v364 = vld [vmem:[%s202 + $0x348] sm:$0xff]
      %v365 = vld [vmem:[%s202 + $0x350] sm:$0xff]
      %v366 = vld [vmem:[%s202 + $0x358] sm:$0xff]
      %v367 = vld [vmem:[%s202 + $0x360] sm:$0xff]
      %v368 = vld [vmem:[%s202 + $0x368] sm:$0xff]
      %v369 = vld [vmem:[%s202 + $0x370] sm:$0xff]
      %v370 = vld [vmem:[%s202 + $0x378] sm:$0xff]
      %v371 = vld [vmem:[%s202 + $0x380] sm:$0xff]
      %v372 = vld [vmem:[%s202 + $0x388] sm:$0xff]
      %v373 = vld [vmem:[%s202 + $0x390] sm:$0xff]
      %v374 = vld [vmem:[%s202 + $0x398] sm:$0xff]
      %v375 = vld [vmem:[%s202 + $0x3a0] sm:$0xff]
      %v376 = vld [vmem:[%s202 + $0x3a8] sm:$0xff]
      %v377 = vld [vmem:[%s202 + $0x3b0] sm:$0xff]
      %v378 = vld [vmem:[%s202 + $0x3b8] sm:$0xff]
      %v379 = vld [vmem:[%s202 + $0x3c0] sm:$0xff]
      %v380 = vld [vmem:[%s202 + $0x3c8] sm:$0xff]
      %v381 = vld [vmem:[%s202 + $0x3d0] sm:$0xff]
      %v382 = vld [vmem:[%s202 + $0x3d8] sm:$0xff]
      %v383 = vld [vmem:[%s202 + $0x3e0] sm:$0xff]
      %s384 = sadd.s32 %s24, %s25
      %s385 = smul.u32 %s384, 1000
      %v386 = vlaneseq
      %v387 = vand.u32 %v386, 127
      %v388 = vadd.s32 %v387, 128
      %v389 = vadd.s32 %v387, 256
      %v390 = vadd.s32 %v387, 384
      %v391 = vadd.s32 %v387, 512
      %v392 = vadd.s32 %v387, 640
      %v393 = vadd.s32 %v387, 768
      %v394 = vadd.s32 %v387, 896
      %v395 = vstv %s385
      %v396 = vadd.s32 %v387, %v395
      %v397 = vadd.s32 %v388, %v395
      %v398 = vadd.s32 %v389, %v395
      %v399 = vadd.s32 %v390, %v395
      %v400 = vadd.s32 %v391, %v395
      %v401 = vadd.s32 %v392, %v395
      %v402 = vadd.s32 %v393, %v395
      %v403 = vadd.s32 %v394, %v395
      %vm404 = vcmp.lt.s32.totalorder %v396, 1000
      %vm405 = vcmp.lt.s32.totalorder %v397, 1000
      %vm406 = vcmp.lt.s32.totalorder %v398, 1000
      %vm407 = vcmp.lt.s32.totalorder %v399, 1000
      %vm408 = vcmp.lt.s32.totalorder %v400, 1000
      %vm409 = vcmp.lt.s32.totalorder %v401, 1000
      %vm410 = vcmp.lt.s32.totalorder %v402, 1000
      %vm411 = vcmp.lt.s32.totalorder %v403, 1000
      %v412 = vsel %vm404, 1, 0
      %v413 = vsel %vm405, 1, 0
      %v414 = vsel %vm406, 1, 0
      %v415 = vsel %vm407, 1, 0
      %v416 = vsel %vm408, 1, 0
      %v417 = vsel %vm409, 1, 0
      %v418 = vsel %vm410, 1, 0
      %v419 = vsel %vm411, 1, 0
      %vm420 = vcmp.eq.s32.totalorder %v412, 1
      %vm421 = vcmp.eq.s32.totalorder %v413, 1
      %vm422 = vcmp.eq.s32.totalorder %v414, 1
      %vm423 = vcmp.eq.s32.totalorder %v415, 1
      %vm424 = vcmp.eq.s32.totalorder %v416, 1
      %vm425 = vcmp.eq.s32.totalorder %v417, 1
      %vm426 = vcmp.eq.s32.totalorder %v418, 1
      %vm427 = vcmp.eq.s32.totalorder %v419, 1
      %vm428 = vmand %vm251, %vm420
      %vm429 = vmand %vm252, %vm421
      %vm430 = vmand %vm253, %vm422
      %vm431 = vmand %vm254, %vm423
      %vm432 = vmand %vm255, %vm424
      %vm433 = vmand %vm256, %vm425
      %vm434 = vmand %vm257, %vm426
      %vm435 = vmand %vm258, %vm427
      %v436 = vadd.s32 %v218, 8
      %v437 = vadd.s32 %v218, 16
      %v438 = vadd.s32 %v218, 24
      %v439 = vadd.s32 %v218, 32
      %v440 = vadd.s32 %v218, 40
      %v441 = vadd.s32 %v218, 48
      %v442 = vadd.s32 %v218, 56
      %v443 = vadd.s32 %v218, 64
      %v444 = vadd.s32 %v218, 72
      %v445 = vadd.s32 %v218, 80
      %v446 = vadd.s32 %v218, 88
      %v447 = vadd.s32 %v218, 96
      %v448 = vadd.s32 %v218, 104
      %v449 = vadd.s32 %v218, 112
      %v450 = vadd.s32 %v218, 120
      %v451 = vadd.s32 %v218, 128
      %v452 = vadd.s32 %v218, 136
      %v453 = vadd.s32 %v218, 144
      %v454 = vadd.s32 %v218, 152
      %v455 = vadd.s32 %v218, 160
      %v456 = vadd.s32 %v218, 168
      %v457 = vadd.s32 %v218, 176
      %v458 = vadd.s32 %v218, 184
      %v459 = vadd.s32 %v218, 192
      %v460 = vadd.s32 %v218, 200
      %v461 = vadd.s32 %v218, 208
      %v462 = vadd.s32 %v218, 216
      %v463 = vadd.s32 %v218, 224
      %v464 = vadd.s32 %v218, 232
      %v465 = vadd.s32 %v218, 240
      %v466 = vadd.s32 %v218, 248
      %v467 = vadd.s32 %v218, 256
      %v468 = vadd.s32 %v218, 264
      %v469 = vadd.s32 %v218, 272
      %v470 = vadd.s32 %v218, 280
      %v471 = vadd.s32 %v218, 288
      %v472 = vadd.s32 %v218, 296
      %v473 = vadd.s32 %v218, 304
      %v474 = vadd.s32 %v218, 312
      %v475 = vadd.s32 %v218, 320
      %v476 = vadd.s32 %v218, 328
      %v477 = vadd.s32 %v218, 336
      %v478 = vadd.s32 %v218, 344
      %v479 = vadd.s32 %v218, 352
      %v480 = vadd.s32 %v218, 360
      %v481 = vadd.s32 %v218, 368
      %v482 = vadd.s32 %v218, 376
      %v483 = vadd.s32 %v218, 384
      %v484 = vadd.s32 %v218, 392
      %v485 = vadd.s32 %v218, 400
      %v486 = vadd.s32 %v218, 408
      %v487 = vadd.s32 %v218, 416
      %v488 = vadd.s32 %v218, 424
      %v489 = vadd.s32 %v218, 432
      %v490 = vadd.s32 %v218, 440
      %v491 = vadd.s32 %v218, 448
      %v492 = vadd.s32 %v218, 456
      %v493 = vadd.s32 %v218, 464
      %v494 = vadd.s32 %v218, 472
      %v495 = vadd.s32 %v218, 480
      %v496 = vadd.s32 %v218, 488
      %v497 = vadd.s32 %v218, 496
      %v498 = vadd.s32 %v218, 504
      %v499 = vadd.s32 %v218, 512
      %v500 = vadd.s32 %v218, 520
      %v501 = vadd.s32 %v218, 528
      %v502 = vadd.s32 %v218, 536
      %v503 = vadd.s32 %v218, 544
      %v504 = vadd.s32 %v218, 552
      %v505 = vadd.s32 %v218, 560
      %v506 = vadd.s32 %v218, 568
      %v507 = vadd.s32 %v218, 576
      %v508 = vadd.s32 %v218, 584
      %v509 = vadd.s32 %v218, 592
      %v510 = vadd.s32 %v218, 600
      %v511 = vadd.s32 %v218, 608
      %v512 = vadd.s32 %v218, 616
      %v513 = vadd.s32 %v218, 624
      %v514 = vadd.s32 %v218, 632
      %v515 = vadd.s32 %v218, 640
      %v516 = vadd.s32 %v218, 648
      %v517 = vadd.s32 %v218, 656
      %v518 = vadd.s32 %v218, 664
      %v519 = vadd.s32 %v218, 672
      %v520 = vadd.s32 %v218, 680
      %v521 = vadd.s32 %v218, 688
      %v522 = vadd.s32 %v218, 696
      %v523 = vadd.s32 %v218, 704
      %v524 = vadd.s32 %v218, 712
      %v525 = vadd.s32 %v218, 720
      %v526 = vadd.s32 %v218, 728
      %v527 = vadd.s32 %v218, 736
      %v528 = vadd.s32 %v218, 744
      %v529 = vadd.s32 %v218, 752
      %v530 = vadd.s32 %v218, 760
      %v531 = vadd.s32 %v218, 768
      %v532 = vadd.s32 %v218, 776
      %v533 = vadd.s32 %v218, 784
      %v534 = vadd.s32 %v218, 792
      %v535 = vadd.s32 %v218, 800
      %v536 = vadd.s32 %v218, 808
      %v537 = vadd.s32 %v218, 816
      %v538 = vadd.s32 %v218, 824
      %v539 = vadd.s32 %v218, 832
      %v540 = vadd.s32 %v218, 840
      %v541 = vadd.s32 %v218, 848
      %v542 = vadd.s32 %v218, 856
      %v543 = vadd.s32 %v218, 864
      %v544 = vadd.s32 %v218, 872
      %v545 = vadd.s32 %v218, 880
      %v546 = vadd.s32 %v218, 888
      %v547 = vadd.s32 %v218, 896
      %v548 = vadd.s32 %v218, 904
      %v549 = vadd.s32 %v218, 912
      %v550 = vadd.s32 %v218, 920
      %v551 = vadd.s32 %v218, 928
      %v552 = vadd.s32 %v218, 936
      %v553 = vadd.s32 %v218, 944
      %v554 = vadd.s32 %v218, 952
      %v555 = vadd.s32 %v218, 960
      %v556 = vadd.s32 %v218, 968
      %v557 = vadd.s32 %v218, 976
      %v558 = vadd.s32 %v218, 984
      %v559 = vadd.s32 %v218, 992
      %v560 = vadd.s32 %v218, %v395
      %v561 = vadd.s32 %v436, %v395
      %v562 = vadd.s32 %v437, %v395
      %v563 = vadd.s32 %v438, %v395
      %v564 = vadd.s32 %v439, %v395
      %v565 = vadd.s32 %v440, %v395
      %v566 = vadd.s32 %v441, %v395
      %v567 = vadd.s32 %v442, %v395
      %v568 = vadd.s32 %v443, %v395
      %v569 = vadd.s32 %v444, %v395
      %v570 = vadd.s32 %v445, %v395
      %v571 = vadd.s32 %v446, %v395
      %v572 = vadd.s32 %v447, %v395
      %v573 = vadd.s32 %v448, %v395
      %v574 = vadd.s32 %v449, %v395
      %v575 = vadd.s32 %v450, %v395
      %v576 = vadd.s32 %v451, %v395
      %v577 = vadd.s32 %v452, %v395
      %v578 = vadd.s32 %v453, %v395
      %v579 = vadd.s32 %v454, %v395
      %v580 = vadd.s32 %v455, %v395
      %v581 = vadd.s32 %v456, %v395
      %v582 = vadd.s32 %v457, %v395
      %v583 = vadd.s32 %v458, %v395
      %v584 = vadd.s32 %v459, %v395
      %v585 = vadd.s32 %v460, %v395
      %v586 = vadd.s32 %v461, %v395
      %v587 = vadd.s32 %v462, %v395
      %v588 = vadd.s32 %v463, %v395
      %v589 = vadd.s32 %v464, %v395
      %v590 = vadd.s32 %v465, %v395
      %v591 = vadd.s32 %v466, %v395
      %v592 = vadd.s32 %v467, %v395
      %v593 = vadd.s32 %v468, %v395
      %v594 = vadd.s32 %v469, %v395
      %v595 = vadd.s32 %v470, %v395
      %v596 = vadd.s32 %v471, %v395
      %v597 = vadd.s32 %v472, %v395
      %v598 = vadd.s32 %v473, %v395
      %v599 = vadd.s32 %v474, %v395
      %v600 = vadd.s32 %v475, %v395
      %v601 = vadd.s32 %v476, %v395
      %v602 = vadd.s32 %v477, %v395
      %v603 = vadd.s32 %v478, %v395
      %v604 = vadd.s32 %v479, %v395
      %v605 = vadd.s32 %v480, %v395
      %v606 = vadd.s32 %v481, %v395
      %v607 = vadd.s32 %v482, %v395
      %v608 = vadd.s32 %v483, %v395
      %v609 = vadd.s32 %v484, %v395
      %v610 = vadd.s32 %v485, %v395
      %v611 = vadd.s32 %v486, %v395
      %v612 = vadd.s32 %v487, %v395
      %v613 = vadd.s32 %v488, %v395
      %v614 = vadd.s32 %v489, %v395
      %v615 = vadd.s32 %v490, %v395
      %v616 = vadd.s32 %v491, %v395
      %v617 = vadd.s32 %v492, %v395
      %v618 = vadd.s32 %v493, %v395
      %v619 = vadd.s32 %v494, %v395
      %v620 = vadd.s32 %v495, %v395
      %v621 = vadd.s32 %v496, %v395
      %v622 = vadd.s32 %v497, %v395
      %v623 = vadd.s32 %v498, %v395
      %v624 = vadd.s32 %v499, %v395
      %v625 = vadd.s32 %v500, %v395
      %v626 = vadd.s32 %v501, %v395
      %v627 = vadd.s32 %v502, %v395
      %v628 = vadd.s32 %v503, %v395
      %v629 = vadd.s32 %v504, %v395
      %v630 = vadd.s32 %v505, %v395
      %v631 = vadd.s32 %v506, %v395
      %v632 = vadd.s32 %v507, %v395
      %v633 = vadd.s32 %v508, %v395
      %v634 = vadd.s32 %v509, %v395
      %v635 = vadd.s32 %v510, %v395
      %v636 = vadd.s32 %v511, %v395
      %v637 = vadd.s32 %v512, %v395
      %v638 = vadd.s32 %v513, %v395
      %v639 = vadd.s32 %v514, %v395
      %v640 = vadd.s32 %v515, %v395
      %v641 = vadd.s32 %v516, %v395
      %v642 = vadd.s32 %v517, %v395
      %v643 = vadd.s32 %v518, %v395
      %v644 = vadd.s32 %v519, %v395
      %v645 = vadd.s32 %v520, %v395
      %v646 = vadd.s32 %v521, %v395
      %v647 = vadd.s32 %v522, %v395
      %v648 = vadd.s32 %v523, %v395
      %v649 = vadd.s32 %v524, %v395
      %v650 = vadd.s32 %v525, %v395
      %v651 = vadd.s32 %v526, %v395
      %v652 = vadd.s32 %v527, %v395
      %v653 = vadd.s32 %v528, %v395
      %v654 = vadd.s32 %v529, %v395
      %v655 = vadd.s32 %v530, %v395
      %v656 = vadd.s32 %v531, %v395
      %v657 = vadd.s32 %v532, %v395
      %v658 = vadd.s32 %v533, %v395
      %v659 = vadd.s32 %v534, %v395
      %v660 = vadd.s32 %v535, %v395
      %v661 = vadd.s32 %v536, %v395
      %v662 = vadd.s32 %v537, %v395
      %v663 = vadd.s32 %v538, %v395
      %v664 = vadd.s32 %v539, %v395
      %v665 = vadd.s32 %v540, %v395
      %v666 = vadd.s32 %v541, %v395
      %v667 = vadd.s32 %v542, %v395
      %v668 = vadd.s32 %v543, %v395
      %v669 = vadd.s32 %v544, %v395
      %v670 = vadd.s32 %v545, %v395
      %v671 = vadd.s32 %v546, %v395
      %v672 = vadd.s32 %v547, %v395
      %v673 = vadd.s32 %v548, %v395
      %v674 = vadd.s32 %v549, %v395
      %v675 = vadd.s32 %v550, %v395
      %v676 = vadd.s32 %v551, %v395
      %v677 = vadd.s32 %v552, %v395
      %v678 = vadd.s32 %v553, %v395
      %v679 = vadd.s32 %v554, %v395
      %v680 = vadd.s32 %v555, %v395
      %v681 = vadd.s32 %v556, %v395
      %v682 = vadd.s32 %v557, %v395
      %v683 = vadd.s32 %v558, %v395
      %v684 = vadd.s32 %v559, %v395
      %vm685 = vcmp.lt.s32.totalorder %v560, 1000
      %vm686 = vcmp.lt.s32.totalorder %v561, 1000
      %vm687 = vcmp.lt.s32.totalorder %v562, 1000
      %vm688 = vcmp.lt.s32.totalorder %v563, 1000
      %vm689 = vcmp.lt.s32.totalorder %v564, 1000
      %vm690 = vcmp.lt.s32.totalorder %v565, 1000
      %vm691 = vcmp.lt.s32.totalorder %v566, 1000
      %vm692 = vcmp.lt.s32.totalorder %v567, 1000
      %vm693 = vcmp.lt.s32.totalorder %v568, 1000
      %vm694 = vcmp.lt.s32.totalorder %v569, 1000
      %vm695 = vcmp.lt.s32.totalorder %v570, 1000
      %vm696 = vcmp.lt.s32.totalorder %v571, 1000
      %vm697 = vcmp.lt.s32.totalorder %v572, 1000
      %vm698 = vcmp.lt.s32.totalorder %v573, 1000
      %vm699 = vcmp.lt.s32.totalorder %v574, 1000
      %vm700 = vcmp.lt.s32.totalorder %v575, 1000
      %vm701 = vcmp.lt.s32.totalorder %v576, 1000
      %vm702 = vcmp.lt.s32.totalorder %v577, 1000
      %vm703 = vcmp.lt.s32.totalorder %v578, 1000
      %vm704 = vcmp.lt.s32.totalorder %v579, 1000
      %vm705 = vcmp.lt.s32.totalorder %v580, 1000
      %vm706 = vcmp.lt.s32.totalorder %v581, 1000
      %vm707 = vcmp.lt.s32.totalorder %v582, 1000
      %vm708 = vcmp.lt.s32.totalorder %v583, 1000
      %vm709 = vcmp.lt.s32.totalorder %v584, 1000
      %vm710 = vcmp.lt.s32.totalorder %v585, 1000
      %vm711 = vcmp.lt.s32.totalorder %v586, 1000
      %vm712 = vcmp.lt.s32.totalorder %v587, 1000
      %vm713 = vcmp.lt.s32.totalorder %v588, 1000
      %vm714 = vcmp.lt.s32.totalorder %v589, 1000
      %vm715 = vcmp.lt.s32.totalorder %v590, 1000
      %vm716 = vcmp.lt.s32.totalorder %v591, 1000
      %vm717 = vcmp.lt.s32.totalorder %v592, 1000
      %vm718 = vcmp.lt.s32.totalorder %v593, 1000
      %vm719 = vcmp.lt.s32.totalorder %v594, 1000
      %vm720 = vcmp.lt.s32.totalorder %v595, 1000
      %vm721 = vcmp.lt.s32.totalorder %v596, 1000
      %vm722 = vcmp.lt.s32.totalorder %v597, 1000
      %vm723 = vcmp.lt.s32.totalorder %v598, 1000
      %vm724 = vcmp.lt.s32.totalorder %v599, 1000
      %vm725 = vcmp.lt.s32.totalorder %v600, 1000
      %vm726 = vcmp.lt.s32.totalorder %v601, 1000
      %vm727 = vcmp.lt.s32.totalorder %v602, 1000
      %vm728 = vcmp.lt.s32.totalorder %v603, 1000
      %vm729 = vcmp.lt.s32.totalorder %v604, 1000
      %vm730 = vcmp.lt.s32.totalorder %v605, 1000
      %vm731 = vcmp.lt.s32.totalorder %v606, 1000
      %vm732 = vcmp.lt.s32.totalorder %v607, 1000
      %vm733 = vcmp.lt.s32.totalorder %v608, 1000
      %vm734 = vcmp.lt.s32.totalorder %v609, 1000
      %vm735 = vcmp.lt.s32.totalorder %v610, 1000
      %vm736 = vcmp.lt.s32.totalorder %v611, 1000
      %vm737 = vcmp.lt.s32.totalorder %v612, 1000
      %vm738 = vcmp.lt.s32.totalorder %v613, 1000
      %vm739 = vcmp.lt.s32.totalorder %v614, 1000
      %vm740 = vcmp.lt.s32.totalorder %v615, 1000
      %vm741 = vcmp.lt.s32.totalorder %v616, 1000
      %vm742 = vcmp.lt.s32.totalorder %v617, 1000
      %vm743 = vcmp.lt.s32.totalorder %v618, 1000
      %vm744 = vcmp.lt.s32.totalorder %v619, 1000
      %vm745 = vcmp.lt.s32.totalorder %v620, 1000
      %vm746 = vcmp.lt.s32.totalorder %v621, 1000
      %vm747 = vcmp.lt.s32.totalorder %v622, 1000
      %vm748 = vcmp.lt.s32.totalorder %v623, 1000
      %vm749 = vcmp.lt.s32.totalorder %v624, 1000
      %vm750 = vcmp.lt.s32.totalorder %v625, 1000
      %vm751 = vcmp.lt.s32.totalorder %v626, 1000
      %vm752 = vcmp.lt.s32.totalorder %v627, 1000
      %vm753 = vcmp.lt.s32.totalorder %v628, 1000
      %vm754 = vcmp.lt.s32.totalorder %v629, 1000
      %vm755 = vcmp.lt.s32.totalorder %v630, 1000
      %vm756 = vcmp.lt.s32.totalorder %v631, 1000
      %vm757 = vcmp.lt.s32.totalorder %v632, 1000
      %vm758 = vcmp.lt.s32.totalorder %v633, 1000
      %vm759 = vcmp.lt.s32.totalorder %v634, 1000
      %vm760 = vcmp.lt.s32.totalorder %v635, 1000
      %vm761 = vcmp.lt.s32.totalorder %v636, 1000
      %vm762 = vcmp.lt.s32.totalorder %v637, 1000
      %vm763 = vcmp.lt.s32.totalorder %v638, 1000
      %vm764 = vcmp.lt.s32.totalorder %v639, 1000
      %vm765 = vcmp.lt.s32.totalorder %v640, 1000
      %vm766 = vcmp.lt.s32.totalorder %v641, 1000
      %vm767 = vcmp.lt.s32.totalorder %v642, 1000
      %vm768 = vcmp.lt.s32.totalorder %v643, 1000
      %vm769 = vcmp.lt.s32.totalorder %v644, 1000
      %vm770 = vcmp.lt.s32.totalorder %v645, 1000
      %vm771 = vcmp.lt.s32.totalorder %v646, 1000
      %vm772 = vcmp.lt.s32.totalorder %v647, 1000
      %vm773 = vcmp.lt.s32.totalorder %v648, 1000
      %vm774 = vcmp.lt.s32.totalorder %v649, 1000
      %vm775 = vcmp.lt.s32.totalorder %v650, 1000
      %vm776 = vcmp.lt.s32.totalorder %v651, 1000
      %vm777 = vcmp.lt.s32.totalorder %v652, 1000
      %vm778 = vcmp.lt.s32.totalorder %v653, 1000
      %vm779 = vcmp.lt.s32.totalorder %v654, 1000
      %vm780 = vcmp.lt.s32.totalorder %v655, 1000
      %vm781 = vcmp.lt.s32.totalorder %v656, 1000
      %vm782 = vcmp.lt.s32.totalorder %v657, 1000
      %vm783 = vcmp.lt.s32.totalorder %v658, 1000
      %vm784 = vcmp.lt.s32.totalorder %v659, 1000
      %vm785 = vcmp.lt.s32.totalorder %v660, 1000
      %vm786 = vcmp.lt.s32.totalorder %v661, 1000
      %vm787 = vcmp.lt.s32.totalorder %v662, 1000
      %vm788 = vcmp.lt.s32.totalorder %v663, 1000
      %vm789 = vcmp.lt.s32.totalorder %v664, 1000
      %vm790 = vcmp.lt.s32.totalorder %v665, 1000
      %vm791 = vcmp.lt.s32.totalorder %v666, 1000
      %vm792 = vcmp.lt.s32.totalorder %v667, 1000
      %vm793 = vcmp.lt.s32.totalorder %v668, 1000
      %vm794 = vcmp.lt.s32.totalorder %v669, 1000
      %vm795 = vcmp.lt.s32.totalorder %v670, 1000
      %vm796 = vcmp.lt.s32.totalorder %v671, 1000
      %vm797 = vcmp.lt.s32.totalorder %v672, 1000
      %vm798 = vcmp.lt.s32.totalorder %v673, 1000
      %vm799 = vcmp.lt.s32.totalorder %v674, 1000
      %vm800 = vcmp.lt.s32.totalorder %v675, 1000
      %vm801 = vcmp.lt.s32.totalorder %v676, 1000
      %vm802 = vcmp.lt.s32.totalorder %v677, 1000
      %vm803 = vcmp.lt.s32.totalorder %v678, 1000
      %vm804 = vcmp.lt.s32.totalorder %v679, 1000
      %vm805 = vcmp.lt.s32.totalorder %v680, 1000
      %vm806 = vcmp.lt.s32.totalorder %v681, 1000
      %vm807 = vcmp.lt.s32.totalorder %v682, 1000
      %vm808 = vcmp.lt.s32.totalorder %v683, 1000
      %vm809 = vcmp.lt.s32.totalorder %v684, 1000
      %v810 = vsel %vm685, 1, 0
      %v811 = vsel %vm686, 1, 0
      %v812 = vsel %vm687, 1, 0
      %v813 = vsel %vm688, 1, 0
      %v814 = vsel %vm689, 1, 0
      %v815 = vsel %vm690, 1, 0
      %v816 = vsel %vm691, 1, 0
      %v817 = vsel %vm692, 1, 0
      %v818 = vsel %vm693, 1, 0
      %v819 = vsel %vm694, 1, 0
      %v820 = vsel %vm695, 1, 0
      %v821 = vsel %vm696, 1, 0
      %v822 = vsel %vm697, 1, 0
      %v823 = vsel %vm698, 1, 0
      %v824 = vsel %vm699, 1, 0
      %v825 = vsel %vm700, 1, 0
      %v826 = vsel %vm701, 1, 0
      %v827 = vsel %vm702, 1, 0
      %v828 = vsel %vm703, 1, 0
      %v829 = vsel %vm704, 1, 0
      %v830 = vsel %vm705, 1, 0
      %v831 = vsel %vm706, 1, 0
      %v832 = vsel %vm707, 1, 0
      %v833 = vsel %vm708, 1, 0
      %v834 = vsel %vm709, 1, 0
      %v835 = vsel %vm710, 1, 0
      %v836 = vsel %vm711, 1, 0
      %v837 = vsel %vm712, 1, 0
      %v838 = vsel %vm713, 1, 0
      %v839 = vsel %vm714, 1, 0
      %v840 = vsel %vm715, 1, 0
      %v841 = vsel %vm716, 1, 0
      %v842 = vsel %vm717, 1, 0
      %v843 = vsel %vm718, 1, 0
      %v844 = vsel %vm719, 1, 0
      %v845 = vsel %vm720, 1, 0
      %v846 = vsel %vm721, 1, 0
      %v847 = vsel %vm722, 1, 0
      %v848 = vsel %vm723, 1, 0
      %v849 = vsel %vm724, 1, 0
      %v850 = vsel %vm725, 1, 0
      %v851 = vsel %vm726, 1, 0
      %v852 = vsel %vm727, 1, 0
      %v853 = vsel %vm728, 1, 0
      %v854 = vsel %vm729, 1, 0
      %v855 = vsel %vm730, 1, 0
      %v856 = vsel %vm731, 1, 0
      %v857 = vsel %vm732, 1, 0
      %v858 = vsel %vm733, 1, 0
      %v859 = vsel %vm734, 1, 0
      %v860 = vsel %vm735, 1, 0
      %v861 = vsel %vm736, 1, 0
      %v862 = vsel %vm737, 1, 0
      %v863 = vsel %vm738, 1, 0
      %v864 = vsel %vm739, 1, 0
      %v865 = vsel %vm740, 1, 0
      %v866 = vsel %vm741, 1, 0
      %v867 = vsel %vm742, 1, 0
      %v868 = vsel %vm743, 1, 0
      %v869 = vsel %vm744, 1, 0
      %v870 = vsel %vm745, 1, 0
      %v871 = vsel %vm746, 1, 0
      %v872 = vsel %vm747, 1, 0
      %v873 = vsel %vm748, 1, 0
      %v874 = vsel %vm749, 1, 0
      %v875 = vsel %vm750, 1, 0
      %v876 = vsel %vm751, 1, 0
      %v877 = vsel %vm752, 1, 0
      %v878 = vsel %vm753, 1, 0
      %v879 = vsel %vm754, 1, 0
      %v880 = vsel %vm755, 1, 0
      %v881 = vsel %vm756, 1, 0
      %v882 = vsel %vm757, 1, 0
      %v883 = vsel %vm758, 1, 0
      %v884 = vsel %vm759, 1, 0
      %v885 = vsel %vm760, 1, 0
      %v886 = vsel %vm761, 1, 0
      %v887 = vsel %vm762, 1, 0
      %v888 = vsel %vm763, 1, 0
      %v889 = vsel %vm764, 1, 0
      %v890 = vsel %vm765, 1, 0
      %v891 = vsel %vm766, 1, 0
      %v892 = vsel %vm767, 1, 0
      %v893 = vsel %vm768, 1, 0
      %v894 = vsel %vm769, 1, 0
      %v895 = vsel %vm770, 1, 0
      %v896 = vsel %vm771, 1, 0
      %v897 = vsel %vm772, 1, 0
      %v898 = vsel %vm773, 1, 0
      %v899 = vsel %vm774, 1, 0
      %v900 = vsel %vm775, 1, 0
      %v901 = vsel %vm776, 1, 0
      %v902 = vsel %vm777, 1, 0
      %v903 = vsel %vm778, 1, 0
      %v904 = vsel %vm779, 1, 0
      %v905 = vsel %vm780, 1, 0
      %v906 = vsel %vm781, 1, 0
      %v907 = vsel %vm782, 1, 0
      %v908 = vsel %vm783, 1, 0
      %v909 = vsel %vm784, 1, 0
      %v910 = vsel %vm785, 1, 0
      %v911 = vsel %vm786, 1, 0
      %v912 = vsel %vm787, 1, 0
      %v913 = vsel %vm788, 1, 0
      %v914 = vsel %vm789, 1, 0
      %v915 = vsel %vm790, 1, 0
      %v916 = vsel %vm791, 1, 0
      %v917 = vsel %vm792, 1, 0
      %v918 = vsel %vm793, 1, 0
      %v919 = vsel %vm794, 1, 0
      %v920 = vsel %vm795, 1, 0
      %v921 = vsel %vm796, 1, 0
      %v922 = vsel %vm797, 1, 0
      %v923 = vsel %vm798, 1, 0
      %v924 = vsel %vm799, 1, 0
      %v925 = vsel %vm800, 1, 0
      %v926 = vsel %vm801, 1, 0
      %v927 = vsel %vm802, 1, 0
      %v928 = vsel %vm803, 1, 0
      %v929 = vsel %vm804, 1, 0
      %v930 = vsel %vm805, 1, 0
      %v931 = vsel %vm806, 1, 0
      %v932 = vsel %vm807, 1, 0
      %v933 = vsel %vm808, 1, 0
      %v934 = vsel %vm809, 1, 0
      %vm935 = vcmp.eq.s32.totalorder %v810, 1
      %vm936 = vcmp.eq.s32.totalorder %v811, 1
      %vm937 = vcmp.eq.s32.totalorder %v812, 1
      %vm938 = vcmp.eq.s32.totalorder %v813, 1
      %vm939 = vcmp.eq.s32.totalorder %v814, 1
      %vm940 = vcmp.eq.s32.totalorder %v815, 1
      %vm941 = vcmp.eq.s32.totalorder %v816, 1
      %vm942 = vcmp.eq.s32.totalorder %v817, 1
      %vm943 = vcmp.eq.s32.totalorder %v818, 1
      %vm944 = vcmp.eq.s32.totalorder %v819, 1
      %vm945 = vcmp.eq.s32.totalorder %v820, 1
      %vm946 = vcmp.eq.s32.totalorder %v821, 1
      %vm947 = vcmp.eq.s32.totalorder %v822, 1
      %vm948 = vcmp.eq.s32.totalorder %v823, 1
      %vm949 = vcmp.eq.s32.totalorder %v824, 1
      %vm950 = vcmp.eq.s32.totalorder %v825, 1
      %vm951 = vcmp.eq.s32.totalorder %v826, 1
      %vm952 = vcmp.eq.s32.totalorder %v827, 1
      %vm953 = vcmp.eq.s32.totalorder %v828, 1
      %vm954 = vcmp.eq.s32.totalorder %v829, 1
      %vm955 = vcmp.eq.s32.totalorder %v830, 1
      %vm956 = vcmp.eq.s32.totalorder %v831, 1
      %vm957 = vcmp.eq.s32.totalorder %v832, 1
      %vm958 = vcmp.eq.s32.totalorder %v833, 1
      %vm959 = vcmp.eq.s32.totalorder %v834, 1
      %vm960 = vcmp.eq.s32.totalorder %v835, 1
      %vm961 = vcmp.eq.s32.totalorder %v836, 1
      %vm962 = vcmp.eq.s32.totalorder %v837, 1
      %vm963 = vcmp.eq.s32.totalorder %v838, 1
      %vm964 = vcmp.eq.s32.totalorder %v839, 1
      %vm965 = vcmp.eq.s32.totalorder %v840, 1
      %vm966 = vcmp.eq.s32.totalorder %v841, 1
      %vm967 = vcmp.eq.s32.totalorder %v842, 1
      %vm968 = vcmp.eq.s32.totalorder %v843, 1
      %vm969 = vcmp.eq.s32.totalorder %v844, 1
      %vm970 = vcmp.eq.s32.totalorder %v845, 1
      %vm971 = vcmp.eq.s32.totalorder %v846, 1
      %vm972 = vcmp.eq.s32.totalorder %v847, 1
      %vm973 = vcmp.eq.s32.totalorder %v848, 1
      %vm974 = vcmp.eq.s32.totalorder %v849, 1
      %vm975 = vcmp.eq.s32.totalorder %v850, 1
      %vm976 = vcmp.eq.s32.totalorder %v851, 1
      %vm977 = vcmp.eq.s32.totalorder %v852, 1
      %vm978 = vcmp.eq.s32.totalorder %v853, 1
      %vm979 = vcmp.eq.s32.totalorder %v854, 1
      %vm980 = vcmp.eq.s32.totalorder %v855, 1
      %vm981 = vcmp.eq.s32.totalorder %v856, 1
      %vm982 = vcmp.eq.s32.totalorder %v857, 1
      %vm983 = vcmp.eq.s32.totalorder %v858, 1
      %vm984 = vcmp.eq.s32.totalorder %v859, 1
      %vm985 = vcmp.eq.s32.totalorder %v860, 1
      %vm986 = vcmp.eq.s32.totalorder %v861, 1
      %vm987 = vcmp.eq.s32.totalorder %v862, 1
      %vm988 = vcmp.eq.s32.totalorder %v863, 1
      %vm989 = vcmp.eq.s32.totalorder %v864, 1
      %vm990 = vcmp.eq.s32.totalorder %v865, 1
      %vm991 = vcmp.eq.s32.totalorder %v866, 1
      %vm992 = vcmp.eq.s32.totalorder %v867, 1
      %vm993 = vcmp.eq.s32.totalorder %v868, 1
      %vm994 = vcmp.eq.s32.totalorder %v869, 1
      %vm995 = vcmp.eq.s32.totalorder %v870, 1
      %vm996 = vcmp.eq.s32.totalorder %v871, 1
      %vm997 = vcmp.eq.s32.totalorder %v872, 1
      %vm998 = vcmp.eq.s32.totalorder %v873, 1
      %vm999 = vcmp.eq.s32.totalorder %v874, 1
      %vm1000 = vcmp.eq.s32.totalorder %v875, 1
      %vm1001 = vcmp.eq.s32.totalorder %v876, 1
      %vm1002 = vcmp.eq.s32.totalorder %v877, 1
      %vm1003 = vcmp.eq.s32.totalorder %v878, 1
      %vm1004 = vcmp.eq.s32.totalorder %v879, 1
      %vm1005 = vcmp.eq.s32.totalorder %v880, 1
      %vm1006 = vcmp.eq.s32.totalorder %v881, 1
      %vm1007 = vcmp.eq.s32.totalorder %v882, 1
      %vm1008 = vcmp.eq.s32.totalorder %v883, 1
      %vm1009 = vcmp.eq.s32.totalorder %v884, 1
      %vm1010 = vcmp.eq.s32.totalorder %v885, 1
      %vm1011 = vcmp.eq.s32.totalorder %v886, 1
      %vm1012 = vcmp.eq.s32.totalorder %v887, 1
      %vm1013 = vcmp.eq.s32.totalorder %v888, 1
      %vm1014 = vcmp.eq.s32.totalorder %v889, 1
      %vm1015 = vcmp.eq.s32.totalorder %v890, 1
      %vm1016 = vcmp.eq.s32.totalorder %v891, 1
      %vm1017 = vcmp.eq.s32.totalorder %v892, 1
      %vm1018 = vcmp.eq.s32.totalorder %v893, 1
      %vm1019 = vcmp.eq.s32.totalorder %v894, 1
      %vm1020 = vcmp.eq.s32.totalorder %v895, 1
      %vm1021 = vcmp.eq.s32.totalorder %v896, 1
      %vm1022 = vcmp.eq.s32.totalorder %v897, 1
      %vm1023 = vcmp.eq.s32.totalorder %v898, 1
      %vm1024 = vcmp.eq.s32.totalorder %v899, 1
      %vm1025 = vcmp.eq.s32.totalorder %v900, 1
      %vm1026 = vcmp.eq.s32.totalorder %v901, 1
      %vm1027 = vcmp.eq.s32.totalorder %v902, 1
      %vm1028 = vcmp.eq.s32.totalorder %v903, 1
      %vm1029 = vcmp.eq.s32.totalorder %v904, 1
      %vm1030 = vcmp.eq.s32.totalorder %v905, 1
      %vm1031 = vcmp.eq.s32.totalorder %v906, 1
      %vm1032 = vcmp.eq.s32.totalorder %v907, 1
      %vm1033 = vcmp.eq.s32.totalorder %v908, 1
      %vm1034 = vcmp.eq.s32.totalorder %v909, 1
      %vm1035 = vcmp.eq.s32.totalorder %v910, 1
      %vm1036 = vcmp.eq.s32.totalorder %v911, 1
      %vm1037 = vcmp.eq.s32.totalorder %v912, 1
      %vm1038 = vcmp.eq.s32.totalorder %v913, 1
      %vm1039 = vcmp.eq.s32.totalorder %v914, 1
      %vm1040 = vcmp.eq.s32.totalorder %v915, 1
      %vm1041 = vcmp.eq.s32.totalorder %v916, 1
      %vm1042 = vcmp.eq.s32.totalorder %v917, 1
      %vm1043 = vcmp.eq.s32.totalorder %v918, 1
      %vm1044 = vcmp.eq.s32.totalorder %v919, 1
      %vm1045 = vcmp.eq.s32.totalorder %v920, 1
      %vm1046 = vcmp.eq.s32.totalorder %v921, 1
      %vm1047 = vcmp.eq.s32.totalorder %v922, 1
      %vm1048 = vcmp.eq.s32.totalorder %v923, 1
      %vm1049 = vcmp.eq.s32.totalorder %v924, 1
      %vm1050 = vcmp.eq.s32.totalorder %v925, 1
      %vm1051 = vcmp.eq.s32.totalorder %v926, 1
      %vm1052 = vcmp.eq.s32.totalorder %v927, 1
      %vm1053 = vcmp.eq.s32.totalorder %v928, 1
      %vm1054 = vcmp.eq.s32.totalorder %v929, 1
      %vm1055 = vcmp.eq.s32.totalorder %v930, 1
      %vm1056 = vcmp.eq.s32.totalorder %v931, 1
      %vm1057 = vcmp.eq.s32.totalorder %v932, 1
      %vm1058 = vcmp.eq.s32.totalorder %v933, 1
      %vm1059 = vcmp.eq.s32.totalorder %v934, 1
      %v1060 = vsel %vm935, %v259, 0.0
      %v1061 = vsel %vm936, %v260, 0.0
      %v1062 = vsel %vm937, %v261, 0.0
      %v1063 = vsel %vm938, %v262, 0.0
      %v1064 = vsel %vm939, %v263, 0.0
      %v1065 = vsel %vm940, %v264, 0.0
      %v1066 = vsel %vm941, %v265, 0.0
      %v1067 = vsel %vm942, %v266, 0.0
      %v1068 = vsel %vm943, %v267, 0.0
      %v1069 = vsel %vm944, %v268, 0.0
      %v1070 = vsel %vm945, %v269, 0.0
      %v1071 = vsel %vm946, %v270, 0.0
      %v1072 = vsel %vm947, %v271, 0.0
      %v1073 = vsel %vm948, %v272, 0.0
      %v1074 = vsel %vm949, %v273, 0.0
      %v1075 = vsel %vm950, %v274, 0.0
      %v1076 = vsel %vm951, %v275, 0.0
      %v1077 = vsel %vm952, %v276, 0.0
      %v1078 = vsel %vm953, %v277, 0.0
      %v1079 = vsel %vm954, %v278, 0.0
      %v1080 = vsel %vm955, %v279, 0.0
      %v1081 = vsel %vm956, %v280, 0.0
      %v1082 = vsel %vm957, %v281, 0.0
      %v1083 = vsel %vm958, %v282, 0.0
      %v1084 = vsel %vm959, %v283, 0.0
      %v1085 = vsel %vm960, %v284, 0.0
      %v1086 = vsel %vm961, %v285, 0.0
      %v1087 = vsel %vm962, %v286, 0.0
      %v1088 = vsel %vm963, %v287, 0.0
      %v1089 = vsel %vm964, %v288, 0.0
      %v1090 = vsel %vm965, %v289, 0.0
      %v1091 = vsel %vm966, %v290, 0.0
      %v1092 = vsel %vm967, %v291, 0.0
      %v1093 = vsel %vm968, %v292, 0.0
      %v1094 = vsel %vm969, %v293, 0.0
      %v1095 = vsel %vm970, %v294, 0.0
      %v1096 = vsel %vm971, %v295, 0.0
      %v1097 = vsel %vm972, %v296, 0.0
      %v1098 = vsel %vm973, %v297, 0.0
      %v1099 = vsel %vm974, %v298, 0.0
      %v1100 = vsel %vm975, %v299, 0.0
      %v1101 = vsel %vm976, %v300, 0.0
      %v1102 = vsel %vm977, %v301, 0.0
      %v1103 = vsel %vm978, %v302, 0.0
      %v1104 = vsel %vm979, %v303, 0.0
      %v1105 = vsel %vm980, %v304, 0.0
      %v1106 = vsel %vm981, %v305, 0.0
      %v1107 = vsel %vm982, %v306, 0.0
      %v1108 = vsel %vm983, %v307, 0.0
      %v1109 = vsel %vm984, %v308, 0.0
      %v1110 = vsel %vm985, %v309, 0.0
      %v1111 = vsel %vm986, %v310, 0.0
      %v1112 = vsel %vm987, %v311, 0.0
      %v1113 = vsel %vm988, %v312, 0.0
      %v1114 = vsel %vm989, %v313, 0.0
      %v1115 = vsel %vm990, %v314, 0.0
      %v1116 = vsel %vm991, %v315, 0.0
      %v1117 = vsel %vm992, %v316, 0.0
      %v1118 = vsel %vm993, %v317, 0.0
      %v1119 = vsel %vm994, %v318, 0.0
      %v1120 = vsel %vm995, %v319, 0.0
      %v1121 = vsel %vm996, %v320, 0.0
      %v1122 = vsel %vm997, %v321, 0.0
      %v1123 = vsel %vm998, %v322, 0.0
      %v1124 = vsel %vm999, %v323, 0.0
      %v1125 = vsel %vm1000, %v324, 0.0
      %v1126 = vsel %vm1001, %v325, 0.0
      %v1127 = vsel %vm1002, %v326, 0.0
      %v1128 = vsel %vm1003, %v327, 0.0
      %v1129 = vsel %vm1004, %v328, 0.0
      %v1130 = vsel %vm1005, %v329, 0.0
      %v1131 = vsel %vm1006, %v330, 0.0
      %v1132 = vsel %vm1007, %v331, 0.0
      %v1133 = vsel %vm1008, %v332, 0.0
      %v1134 = vsel %vm1009, %v333, 0.0
      %v1135 = vsel %vm1010, %v334, 0.0
      %v1136 = vsel %vm1011, %v335, 0.0
      %v1137 = vsel %vm1012, %v336, 0.0
      %v1138 = vsel %vm1013, %v337, 0.0
      %v1139 = vsel %vm1014, %v338, 0.0
      %v1140 = vsel %vm1015, %v339, 0.0
      %v1141 = vsel %vm1016, %v340, 0.0
      %v1142 = vsel %vm1017, %v341, 0.0
      %v1143 = vsel %vm1018, %v342, 0.0
      %v1144 = vsel %vm1019, %v343, 0.0
      %v1145 = vsel %vm1020, %v344, 0.0
      %v1146 = vsel %vm1021, %v345, 0.0
      %v1147 = vsel %vm1022, %v346, 0.0
      %v1148 = vsel %vm1023, %v347, 0.0
      %v1149 = vsel %vm1024, %v348, 0.0
      %v1150 = vsel %vm1025, %v349, 0.0
      %v1151 = vsel %vm1026, %v350, 0.0
      %v1152 = vsel %vm1027, %v351, 0.0
      %v1153 = vsel %vm1028, %v352, 0.0
      %v1154 = vsel %vm1029, %v353, 0.0
      %v1155 = vsel %vm1030, %v354, 0.0
      %v1156 = vsel %vm1031, %v355, 0.0
      %v1157 = vsel %vm1032, %v356, 0.0
      %v1158 = vsel %vm1033, %v357, 0.0
      %v1159 = vsel %vm1034, %v358, 0.0
      %v1160 = vsel %vm1035, %v359, 0.0
      %v1161 = vsel %vm1036, %v360, 0.0
      %v1162 = vsel %vm1037, %v361, 0.0
      %v1163 = vsel %vm1038, %v362, 0.0
      %v1164 = vsel %vm1039, %v363, 0.0
      %v1165 = vsel %vm1040, %v364, 0.0
      %v1166 = vsel %vm1041, %v365, 0.0
      %v1167 = vsel %vm1042, %v366, 0.0
      %v1168 = vsel %vm1043, %v367, 0.0
      %v1169 = vsel %vm1044, %v368, 0.0
      %v1170 = vsel %vm1045, %v369, 0.0
      %v1171 = vsel %vm1046, %v370, 0.0
      %v1172 = vsel %vm1047, %v371, 0.0
      %v1173 = vsel %vm1048, %v372, 0.0
      %v1174 = vsel %vm1049, %v373, 0.0
      %v1175 = vsel %vm1050, %v374, 0.0
      %v1176 = vsel %vm1051, %v375, 0.0
      %v1177 = vsel %vm1052, %v376, 0.0
      %v1178 = vsel %vm1053, %v377, 0.0
      %v1179 = vsel %vm1054, %v378, 0.0
      %v1180 = vsel %vm1055, %v379, 0.0
      %v1181 = vsel %vm1056, %v380, 0.0
      %v1182 = vsel %vm1057, %v381, 0.0
      %v1183 = vsel %vm1058, %v382, 0.0
      %v1184 = vsel %vm1059, %v383, 0.0
      %v1185 = vsel %vm428, 1, 0
      %v1186 = vsel %vm429, 1, 0
      %v1187 = vsel %vm430, 1, 0
      %v1188 = vsel %vm431, 1, 0
      %v1189 = vsel %vm432, 1, 0
      %v1190 = vsel %vm433, 1, 0
      %v1191 = vsel %vm434, 1, 0
      %v1192 = vsel %vm435, 1, 0
      %v1193 = vcvt.s32.f32 %v1185
      %v1194 = vcvt.s32.f32 %v1186
      %v1195 = vcvt.s32.f32 %v1187
      %v1196 = vcvt.s32.f32 %v1188
      %v1197 = vcvt.s32.f32 %v1189
      %v1198 = vcvt.s32.f32 %v1190
      %v1199 = vcvt.s32.f32 %v1191
      %v1200 = vcvt.s32.f32 %v1192
      %v1201 = vld [vmem:[%s209] sm:$0xff]
      %vm1202 = vcmask 850944
      %v1204 = vsel %vm1202, %v1200, 0
      %1206 = vmatprep.subr.mxu0 0.0
      %1207 = vmatpush1.msra.mxu0 %v1075
      %1208 = vmatprep.subr.mxu0 0.0
      %1209 = vmatpush1.msra.mxu0 %v1074
      %1210 = vmatprep.subr.mxu0 0.0
      %1211 = vmatpush1.msra.mxu0 %v1073
      %1212 = vmatprep.subr.mxu0 0.0
      %1213 = vmatpush1.msra.mxu0 %v1072
      %1214 = vmatprep.subr.mxu0 0.0
      %1215 = vmatpush1.msra.mxu0 %v1071
      %1216 = vmatprep.subr.mxu0 0.0
      %1217 = vmatpush1.msra.mxu0 %v1070
      %1218 = vmatprep.subr.mxu0 0.0
      %1219 = vmatpush1.msra.mxu0 %v1069
      %1220 = vmatprep.subr.mxu0 0.0
      %1221 = vmatpush1.msra.mxu0 %v1068
      %1222 = vmatprep.subr.mxu0 0.0
      %1223 = vmatpush1.msra.mxu0 %v1067
      %1224 = vmatprep.subr.mxu0 0.0
      %1225 = vmatpush1.msra.mxu0 %v1066
      %1226 = vmatprep.subr.mxu0 0.0
      %1227 = vmatpush1.msra.mxu0 %v1065
      %1228 = vmatprep.subr.mxu0 0.0
      %1229 = vmatpush1.msra.mxu0 %v1064
      %1230 = vmatprep.subr.mxu0 0.0
      %1231 = vmatpush1.msra.mxu0 %v1063
      %1232 = vmatprep.subr.mxu0 0.0
      %1233 = vmatpush1.msra.mxu0 %v1062
      %1234 = vmatprep.subr.mxu0 0.0
      %1235 = vmatpush1.msra.mxu0 %v1061
      %1236 = vmatprep.subr.mxu0 0.0
      %1237 = vmatpush1.msra.mxu0 %v1060
      %1238 = vmatprep.subr.mxu0 0.0
      %1239 = vmatpush2.msra.mxu0 %v1091
      %1240 = vmatprep.subr.mxu0 0.0
      %1241 = vmatpush2.msra.mxu0 %v1090
      %1242 = vmatprep.subr.mxu0 0.0
      %1243 = vmatpush2.msra.mxu0 %v1089
      %1244 = vmatprep.subr.mxu0 0.0
      %1245 = vmatpush2.msra.mxu0 %v1088
      %1246 = vmatprep.subr.mxu0 0.0
      %1247 = vmatpush2.msra.mxu0 %v1087
      %1248 = vmatprep.subr.mxu0 0.0
      %1249 = vmatpush2.msra.mxu0 %v1086
      %1250 = vmatprep.subr.mxu0 0.0
      %1251 = vmatpush2.msra.mxu0 %v1085
      %1252 = vmatprep.subr.mxu0 0.0
      %1253 = vmatpush2.msra.mxu0 %v1084
      %1254 = vmatprep.subr.mxu0 0.0
      %1255 = vmatpush2.msra.mxu0 %v1083
      %1256 = vmatprep.subr.mxu0 0.0
      %1257 = vmatpush2.msra.mxu0 %v1082
      %1258 = vmatprep.subr.mxu0 0.0
      %1259 = vmatpush2.msra.mxu0 %v1081
      %1260 = vmatprep.subr.mxu0 0.0
      %1261 = vmatpush2.msra.mxu0 %v1080
      %1262 = vmatprep.subr.mxu0 0.0
      %1263 = vmatpush2.msra.mxu0 %v1079
      %1264 = vmatprep.subr.mxu0 0.0
      %1265 = vmatpush2.msra.mxu0 %v1078
      %1266 = vmatprep.subr.mxu0 0.0
      %1267 = vmatpush2.msra.mxu0 %v1077
      %1268 = vmatprep.subr.mxu0 0.0
      %1269 = vmatpush2.msra.mxu0 %v1076
      %1270 = vmatprep.mubr.f32.mxu0 %v1194
      %1271 = vmatmul.mubr.f32.gmra.mxu0 %v1193
      %v1272 = vpop.f32.mrf.mxu0
      %v1273 = vadd.f32 0.0, %v1272
      %v1274 = vpop.f32.mrf.mxu0
      %1275 = vdwg.mxu0
      %1276 = vmatprep.subr.mxu0 0.0
      %1277 = vmatpush1.msra.mxu0 %v1107
      %1278 = vmatprep.subr.mxu0 0.0
      %1279 = vmatpush1.msra.mxu0 %v1106
      %1280 = vmatprep.subr.mxu0 0.0
      %1281 = vmatpush1.msra.mxu0 %v1105
      %1282 = vmatprep.subr.mxu0 0.0
      %1283 = vmatpush1.msra.mxu0 %v1104
      %1284 = vmatprep.subr.mxu0 0.0
      %1285 = vmatpush1.msra.mxu0 %v1103
      %1286 = vmatprep.subr.mxu0 0.0
      %1287 = vmatpush1.msra.mxu0 %v1102
      %1288 = vmatprep.subr.mxu0 0.0
      %1289 = vmatpush1.msra.mxu0 %v1101
      %1290 = vmatprep.subr.mxu0 0.0
      %1291 = vmatpush1.msra.mxu0 %v1100
      %1292 = vmatprep.subr.mxu0 0.0
      %1293 = vmatpush1.msra.mxu0 %v1099
      %1294 = vmatprep.subr.mxu0 0.0
      %1295 = vmatpush1.msra.mxu0 %v1098
      %1296 = vmatprep.subr.mxu0 0.0
      %1297 = vmatpush1.msra.mxu0 %v1097
      %1298 = vmatprep.subr.mxu0 0.0
      %1299 = vmatpush1.msra.mxu0 %v1096
      %1300 = vmatprep.subr.mxu0 0.0
      %1301 = vmatpush1.msra.mxu0 %v1095
      %1302 = vmatprep.subr.mxu0 0.0
      %1303 = vmatpush1.msra.mxu0 %v1094
      %1304 = vmatprep.subr.mxu0 0.0
      %1305 = vmatpush1.msra.mxu0 %v1093
      %1306 = vmatprep.subr.mxu0 0.0
      %1307 = vmatpush1.msra.mxu0 %v1092
      %1308 = vmatprep.subr.mxu0 0.0
      %1309 = vmatpush2.msra.mxu0 %v1123
      %1310 = vmatprep.subr.mxu0 0.0
      %1311 = vmatpush2.msra.mxu0 %v1122
      %1312 = vmatprep.subr.mxu0 0.0
      %1313 = vmatpush2.msra.mxu0 %v1121
      %1314 = vmatprep.subr.mxu0 0.0
      %1315 = vmatpush2.msra.mxu0 %v1120
      %1316 = vmatprep.subr.mxu0 0.0
      %1317 = vmatpush2.msra.mxu0 %v1119
      %1318 = vmatprep.subr.mxu0 0.0
      %1319 = vmatpush2.msra.mxu0 %v1118
      %1320 = vmatprep.subr.mxu0 0.0
      %1321 = vmatpush2.msra.mxu0 %v1117
      %1322 = vmatprep.subr.mxu0 0.0
      %1323 = vmatpush2.msra.mxu0 %v1116
      %1324 = vmatprep.subr.mxu0 0.0
      %1325 = vmatpush2.msra.mxu0 %v1115
      %1326 = vmatprep.subr.mxu0 0.0
      %1327 = vmatpush2.msra.mxu0 %v1114
      %1328 = vmatprep.subr.mxu0 0.0
      %1329 = vmatpush2.msra.mxu0 %v1113
      %1330 = vmatprep.subr.mxu0 0.0
      %1331 = vmatpush2.msra.mxu0 %v1112
      %1332 = vmatprep.subr.mxu0 0.0
      %1333 = vmatpush2.msra.mxu0 %v1111
      %1334 = vmatprep.subr.mxu0 0.0
      %1335 = vmatpush2.msra.mxu0 %v1110
      %1336 = vmatprep.subr.mxu0 0.0
      %1337 = vmatpush2.msra.mxu0 %v1109
      %1338 = vmatprep.subr.mxu0 0.0
      %1339 = vmatpush2.msra.mxu0 %v1108
      %1340 = vmatprep.mubr.f32.mxu0 %v1196
      %1341 = vmatmul.mubr.f32.gmra.mxu0 %v1195
      %v1342 = vpop.f32.mrf.mxu0
      %v1343 = vadd.f32 %v1273, %v1342
      %v1344 = vpop.f32.mrf.mxu0
      %1345 = vdwg.mxu0
      %1346 = vmatprep.subr.mxu0 0.0
      %1347 = vmatpush1.msra.mxu0 %v1139
      %1348 = vmatprep.subr.mxu0 0.0
      %1349 = vmatpush1.msra.mxu0 %v1138
      %1350 = vmatprep.subr.mxu0 0.0
      %1351 = vmatpush1.msra.mxu0 %v1137
      %1352 = vmatprep.subr.mxu0 0.0
      %1353 = vmatpush1.msra.mxu0 %v1136
      %1354 = vmatprep.subr.mxu0 0.0
      %1355 = vmatpush1.msra.mxu0 %v1135
      %1356 = vmatprep.subr.mxu0 0.0
      %1357 = vmatpush1.msra.mxu0 %v1134
      %1358 = vmatprep.subr.mxu0 0.0
      %1359 = vmatpush1.msra.mxu0 %v1133
      %1360 = vmatprep.subr.mxu0 0.0
      %1361 = vmatpush1.msra.mxu0 %v1132
      %1362 = vmatprep.subr.mxu0 0.0
      %1363 = vmatpush1.msra.mxu0 %v1131
      %1364 = vmatprep.subr.mxu0 0.0
      %1365 = vmatpush1.msra.mxu0 %v1130
      %1366 = vmatprep.subr.mxu0 0.0
      %1367 = vmatpush1.msra.mxu0 %v1129
      %1368 = vmatprep.subr.mxu0 0.0
      %1369 = vmatpush1.msra.mxu0 %v1128
      %1370 = vmatprep.subr.mxu0 0.0
      %1371 = vmatpush1.msra.mxu0 %v1127
      %1372 = vmatprep.subr.mxu0 0.0
      %1373 = vmatpush1.msra.mxu0 %v1126
      %1374 = vmatprep.subr.mxu0 0.0
      %1375 = vmatpush1.msra.mxu0 %v1125
      %1376 = vmatprep.subr.mxu0 0.0
      %1377 = vmatpush1.msra.mxu0 %v1124
      %1378 = vmatprep.subr.mxu0 0.0
      %1379 = vmatpush2.msra.mxu0 %v1155
      %1380 = vmatprep.subr.mxu0 0.0
      %1381 = vmatpush2.msra.mxu0 %v1154
      %1382 = vmatprep.subr.mxu0 0.0
      %1383 = vmatpush2.msra.mxu0 %v1153
      %1384 = vmatprep.subr.mxu0 0.0
      %1385 = vmatpush2.msra.mxu0 %v1152
      %1386 = vmatprep.subr.mxu0 0.0
      %1387 = vmatpush2.msra.mxu0 %v1151
      %1388 = vmatprep.subr.mxu0 0.0
      %1389 = vmatpush2.msra.mxu0 %v1150
      %1390 = vmatprep.subr.mxu0 0.0
      %1391 = vmatpush2.msra.mxu0 %v1149
      %1392 = vmatprep.subr.mxu0 0.0
      %1393 = vmatpush2.msra.mxu0 %v1148
      %1394 = vmatprep.subr.mxu0 0.0
      %1395 = vmatpush2.msra.mxu0 %v1147
      %1396 = vmatprep.subr.mxu0 0.0
      %1397 = vmatpush2.msra.mxu0 %v1146
      %1398 = vmatprep.subr.mxu0 0.0
      %1399 = vmatpush2.msra.mxu0 %v1145
      %1400 = vmatprep.subr.mxu0 0.0
      %1401 = vmatpush2.msra.mxu0 %v1144
      %1402 = vmatprep.subr.mxu0 0.0
      %1403 = vmatpush2.msra.mxu0 %v1143
      %1404 = vmatprep.subr.mxu0 0.0
      %1405 = vmatpush2.msra.mxu0 %v1142
      %1406 = vmatprep.subr.mxu0 0.0
      %1407 = vmatpush2.msra.mxu0 %v1141
      %1408 = vmatprep.subr.mxu0 0.0
      %1409 = vmatpush2.msra.mxu0 %v1140
      %1410 = vmatprep.mubr.f32.mxu0 %v1198
      %1411 = vmatmul.mubr.f32.gmra.mxu0 %v1197
      %v1412 = vpop.f32.mrf.mxu0
      %v1413 = vadd.f32 %v1343, %v1412
      %v1414 = vpop.f32.mrf.mxu0
      %1415 = vdwg.mxu0
      %1416 = vmatprep.subr.mxu0 0.0
      %1417 = vmatpush1.msra.mxu0 %v1171
      %1418 = vmatprep.subr.mxu0 0.0
      %1419 = vmatpush1.msra.mxu0 %v1170
      %1420 = vmatprep.subr.mxu0 0.0
      %1421 = vmatpush1.msra.mxu0 %v1169
      %1422 = vmatprep.subr.mxu0 0.0
      %1423 = vmatpush1.msra.mxu0 %v1168
      %1424 = vmatprep.subr.mxu0 0.0
      %1425 = vmatpush1.msra.mxu0 %v1167
      %1426 = vmatprep.subr.mxu0 0.0
      %1427 = vmatpush1.msra.mxu0 %v1166
      %1428 = vmatprep.subr.mxu0 0.0
      %1429 = vmatpush1.msra.mxu0 %v1165
      %1430 = vmatprep.subr.mxu0 0.0
      %1431 = vmatpush1.msra.mxu0 %v1164
      %1432 = vmatprep.subr.mxu0 0.0
      %1433 = vmatpush1.msra.mxu0 %v1163
      %1434 = vmatprep.subr.mxu0 0.0
      %1435 = vmatpush1.msra.mxu0 %v1162
      %1436 = vmatprep.subr.mxu0 0.0
      %1437 = vmatpush1.msra.mxu0 %v1161
      %1438 = vmatprep.subr.mxu0 0.0
      %1439 = vmatpush1.msra.mxu0 %v1160
      %1440 = vmatprep.subr.mxu0 0.0
      %1441 = vmatpush1.msra.mxu0 %v1159
      %1442 = vmatprep.subr.mxu0 0.0
      %1443 = vmatpush1.msra.mxu0 %v1158
      %1444 = vmatprep.subr.mxu0 0.0
      %1445 = vmatpush1.msra.mxu0 %v1157
      %1446 = vmatprep.subr.mxu0 0.0
      %1447 = vmatpush1.msra.mxu0 %v1156
      %1448 = vmatprep.subr.mxu0 0.0
      %1449 = vmatpush2.msra.mxu0 0.0
      %1450 = vmatprep.subr.mxu0 0.0
      %1451 = vmatpush2.msra.mxu0 0.0
      %1452 = vmatprep.subr.mxu0 0.0
      %1453 = vmatpush2.msra.mxu0 0.0
      %1454 = vmatprep.subr.mxu0 0.0
      %1455 = vmatpush2.msra.mxu0 %v1184
      %1456 = vmatprep.subr.mxu0 0.0
      %1457 = vmatpush2.msra.mxu0 %v1183
      %1458 = vmatprep.subr.mxu0 0.0
      %1459 = vmatpush2.msra.mxu0 %v1182
      %1460 = vmatprep.subr.mxu0 0.0
      %1461 = vmatpush2.msra.mxu0 %v1181
      %1462 = vmatprep.subr.mxu0 0.0
      %1463 = vmatpush2.msra.mxu0 %v1180
      %1464 = vmatprep.subr.mxu0 0.0
      %1465 = vmatpush2.msra.mxu0 %v1179
      %1466 = vmatprep.subr.mxu0 0.0
      %1467 = vmatpush2.msra.mxu0 %v1178
      %1468 = vmatprep.subr.mxu0 0.0
      %1469 = vmatpush2.msra.mxu0 %v1177
      %1470 = vmatprep.subr.mxu0 0.0
      %1471 = vmatpush2.msra.mxu0 %v1176
      %1472 = vmatprep.subr.mxu0 0.0
      %1473 = vmatpush2.msra.mxu0 %v1175
      %1474 = vmatprep.subr.mxu0 0.0
      %1475 = vmatpush2.msra.mxu0 %v1174
      %1476 = vmatprep.subr.mxu0 0.0
      %1477 = vmatpush2.msra.mxu0 %v1173
      %1478 = vmatprep.subr.mxu0 0.0
      %1479 = vmatpush2.msra.mxu0 %v1172
      %1480 = vmatprep.mubr.f32.mxu0 %v1204
      %1481 = vmatmul.mubr.f32.gmra.mxu0 %v1199
      %v1482 = vpop.f32.mrf.mxu0
      %v1483 = vadd.f32 %v1413, %v1482
      %v1484 = vpop.f32.mrf.mxu0
      %1485 = vdwg.mxu0
      %v1486 = vadd.f32 %v1201, %v1483
      %vm1487 = vcmask 130048
      %1488 = vst.msk [vmem:[%s209] sm:$0xff] %vm1487, %v1486
      %p1489 = scmp.lt.s32.totalorder %s24, 1
      %s1490 = scalar_select %p1489, %s24, 1
      %s1491 = smul.addr %s1490, 8
      %s1492 = scalar_lea.vmem %s3, %s1491
      // Predicated region
      $region33: #{simple_mlp_graph_predictor.2} parent=27 // pred_check
        %p1493 = pneg %p110
      $region34: #{simple_mlp_graph_predictor.2} parent=27 // pred_check_branch
        %1495 = sbr.rel (%p1493) target = $region36
      $region35: #{simple_mlp_graph_predictor.2} parent=27 // pred_region
        _
      $region36: #{simple_mlp_graph_predictor.2} parent=27 // pred_fallthru
        _
    $region28: #{simple_mlp_graph_predictor.2} parent=5 // pred_fallthru
      _
    %p1496 = scmp.le.s32.totalorder 2, %s15
    // Predicated region
    $region37: #{simple_mlp_graph_predictor.2} parent=5 // pred_check
      %p1497 = pneg %p1496
    $region38: #{simple_mlp_graph_predictor.2} parent=5 // pred_check_branch
      %1499 = sbr.rel (%p1497) target = $region40
    $region39: #{simple_mlp_graph_predictor.2} parent=5 // pred_region
      %s1500 = ssub.s32 %s15, 2
      // Predicated region
      $region41: #{simple_mlp_graph_predictor.2} parent=39 // pred_check
        %p1501 = pneg %p116
      $region42: #{simple_mlp_graph_predictor.2} parent=39 // pred_check_branch
        %1503 = sbr.rel (%p1501) target = $region44
      $region43: #{simple_mlp_graph_predictor.2} parent=39 // pred_region
        %p1504 = scmp.lt.s32.totalorder %s26, 1
        %s1505 = scalar_select %p1504, %s26, 1
        %s1506 = smul.addr %s1505, 8
        %s1507 = scalar_lea.vmem %s3, %s1506
      $region44: #{simple_mlp_graph_predictor.2} parent=39 // pred_fallthru
        _
    $region40: #{simple_mlp_graph_predictor.2} parent=5 // pred_fallthru
      _
  $region6: #{simple_mlp_graph_predictor.2} parent=0 // loop_footer
    %s19 = sadd.s32 1, %s15
  $region7: #{simple_mlp_graph_predictor.2} parent=0 // loop_footer_branch
    %14 = sbr.rel target = $region3
  $region8: #{simple_mlp_graph_predictor.2} parent=0 // loop_exit
    _

</llo_original>
